<compile_context>
chip_gen: v7x
topology: tpu7x:2x2x1
jax: 0.10.0
libtpu: 0.0.40
codegen_flags: <defaults>
</compile_context>

<pallas_src>
import functools

import numpy as np
import jax
import jax.numpy as jnp
from jax.experimental import pallas as pl
from jax.experimental.pallas import tpu as pltpu

_LN_EPS = 1e-5
_INV_SQRT2 = 0.7071067811865475


def _resnet_block_kernel(x_ref, g1_ref, be1_ref, w1_ref, b1_ref,
                         g2_ref, be2_ref, w2_ref, b2_ref,
                         o_ref, fpad_ref, col_ref, *, B, C, H, W, K, P):
    """Whole batch in one grid step.

    x_ref   : (B, C, H*W)            VMEM, lane-dense NCHW with H,W flattened
    g*/be*  : (1, H*W)               VMEM, LayerNorm gamma/beta repeated along W
    w*_ref  : (C, K*K*C)             VMEM, conv weights, tap-major (kh, kw, ci)
    b*_ref  : (C, 1)                 VMEM, conv bias
    o_ref   : (B, C, H*W)            VMEM, lane-dense output
    fpad_ref: (C, H*W + 2*P*W + 2*P) VMEM scratch, row-flattened zero-haloed conv input
    col_ref : (K*K*C, H*W)           VMEM scratch, im2col patch matrix
    """
    HW = H * W
    base = P * W + P                 # interior offset inside the flat-padded rows

    # w-coordinate of every output lane; masks kill the W-edge wrap-around of
    # the lane-shifted taps. Built once (hoisted out of all loops).
    lane_w = jax.lax.broadcasted_iota(jnp.int32, (1, HW), 1) % W
    col_ok = {dx: jnp.logical_and(lane_w + dx >= 0, lane_w + dx < W)
              for dx in range(-P, P + 1) if dx != 0}

    # Zero the padded scratch ONCE; every conv rewrites only the interior, so
    # the halo stays zero for the whole kernel (no per-conv memsets).
    fpad_ref[...] = jnp.zeros_like(fpad_ref)

    def coset_sum(t):
        # For every lane i, sum of t over {i + j*W (mod H*W), j = 0..H-1}:
        # log2(H) circular rolls on the XLU. Result is already broadcast over
        # each H-group (direction of the rotate is irrelevant for a full coset).
        s = t
        step = W
        while step < HW:
            s = s + pltpu.roll(s, step, axis=1)
            step *= 2
        return s

    def layer_norm(v, g_ref, be_ref):
        # PyTorch LayerNormalization == transpose(2,3) + LayerNorm(H) + transpose
        # back, i.e. normalize over H for every (c, w). In the flat layout that
        # is the stride-W lane coset.
        mu = coset_sum(v) * (1.0 / H)
        d = v - mu
        var = coset_sum(d * d) * (1.0 / H)
        return d * jax.lax.rsqrt(var + _LN_EPS) * g_ref[...] + be_ref[...]

    def gelu(v):
        # exact erf GELU (torch.nn.functional.gelu default)
        return 0.5 * v * (1.0 + jax.lax.erf(v * _INV_SQRT2))

    def conv_same(v, w_ref, bias_ref):
        # 'same' conv, stride 1, as one MXU matmul:
        #     (C, K*K*C) @ (K*K*C, H*W) -> (C, H*W)
        # im2col taps are lane-shifted reads from the zero-haloed flat copy of v.
        fpad_ref[:, pl.ds(base, HW)] = v
        for kh in range(K):
            for kw in range(K):
                tap = fpad_ref[:, pl.ds(kh * W + kw, HW)]          # (C, HW)
                dx = kw - P
                if dx != 0:
                    tap = jnp.where(col_ok[dx], tap, 0.0)
                col_ref[pl.ds((kh * K + kw) * C, C), :] = tap
        out = jnp.dot(w_ref[...], col_ref[...],
                      preferred_element_type=jnp.float32)          # MXU
        return out + bias_ref[...]                                 # bias: (C, 1)

    for b in range(B):                       # whole batch, single grid step
        x = x_ref[b]                         # (C, HW), lane-dense
        h = gelu(layer_norm(x, g1_ref, be1_ref))
        # dropout_1: identity (eval semantics)
        # TODO(synk): training-mode dropout would use pltpu.prng_seed / prng_random_bits
        h = conv_same(h, w1_ref, b1_ref)
        h = gelu(layer_norm(h, g2_ref, be2_ref))
        # dropout_2: identity (eval semantics)
        h = conv_same(h, w2_ref, b2_ref)
        o_ref[b] = h + x                     # residual, lane-dense store


def resnet_block(x, params):
    """x: (B, C, H, W) float32 NCHW. Returns (B, C, H, W) float32."""
    B, C, H, W = x.shape
    K = params["w1"].shape[-1]
    P = K // 2
    HW = H * W
    if H & (H - 1):
        raise ValueError("in-kernel LayerNorm reduction assumes power-of-two H")

    x_flat = x.reshape(B, C, HW).astype(jnp.float32)

    def ln_flat(p):   # (H,) -> (1, H*W): gamma[h] sits at every lane h*W + w
        return jnp.repeat(p.astype(jnp.float32), W)[None, :]

    def conv_w(w):    # OIHW -> (C_out, K*K*C_in), tap-major (kh, kw, ci)
        # (cast to bf16 here, keeping f32 accumulation, for ~2x MXU throughput
        #  on v6e/v7x if the accuracy budget allows)
        return jnp.transpose(w, (0, 2, 3, 1)).reshape(C, K * K * C).astype(jnp.float32)

    g1, be1 = ln_flat(params["ln1_gamma"]), ln_flat(params["ln1_beta"])
    g2, be2 = ln_flat(params["ln2_gamma"]), ln_flat(params["ln2_beta"])
    w1m, w2m = conv_w(params["w1"]), conv_w(params["w2"])
    b1 = params["b1"].astype(jnp.float32).reshape(C, 1)
    b2 = params["b2"].astype(jnp.float32).reshape(C, 1)

    kern = functools.partial(_resnet_block_kernel, B=B, C=C, H=H, W=W, K=K, P=P)

    def full(shape):
        n = len(shape)
        return pl.BlockSpec(shape, lambda i: (0,) * n)

    out_flat = pl.pallas_call(
        kern,
        out_shape=jax.ShapeDtypeStruct((B, C, HW), jnp.float32),
        grid=(1,),
        in_specs=[
            full((B, C, HW)),                      # x
            full((1, HW)), full((1, HW)),          # ln1 gamma/beta
            full((C, K * K * C)), full((C, 1)),    # conv1 weight / bias (VMEM)
            full((1, HW)), full((1, HW)),          # ln2 gamma/beta
            full((C, K * K * C)), full((C, 1)),    # conv2 weight / bias (VMEM)
        ],
        out_specs=full((B, C, HW)),
        scratch_shapes=[
            pltpu.VMEM((C, HW + 2 * P * W + 2 * P), jnp.float32),  # flat-padded conv input
            pltpu.VMEM((K * K * C, HW), jnp.float32),              # im2col patches
        ],
        compiler_params=pltpu.CompilerParams(dimension_semantics=("arbitrary",)),
    )(x_flat, g1, be1, w1m, b1, g2, be2, w2m, b2)

    return out_flat.reshape(B, C, H, W)


def init_params(key, C, H, K):
    """Deterministic synthetic params matching nn.Conv2d / nn.LayerNorm shapes."""
    ks = jax.random.split(key, 4)
    fan_in = C * K * K
    bound = 1.0 / np.sqrt(fan_in)
    return dict(
        w1=jax.random.uniform(ks[0], (C, C, K, K), jnp.float32, -bound, bound),
        b1=jax.random.uniform(ks[1], (C,), jnp.float32, -bound, bound),
        w2=jax.random.uniform(ks[2], (C, C, K, K), jnp.float32, -bound, bound),
        b2=jax.random.uniform(ks[3], (C,), jnp.float32, -bound, bound),
        ln1_gamma=jnp.ones((H,), jnp.float32),
        ln1_beta=jnp.zeros((H,), jnp.float32),
        ln2_gamma=jnp.ones((H,), jnp.float32),
        ln2_beta=jnp.zeros((H,), jnp.float32),
    )


def resnet_ref(x, params):
    """Pure-JAX reference (same math as the PyTorch forward, eval mode)."""
    def ln(v, g, b):
        mu = v.mean(axis=2, keepdims=True)
        var = jnp.square(v - mu).mean(axis=2, keepdims=True)
        vn = (v - mu) / jnp.sqrt(var + _LN_EPS)
        return vn * g[None, None, :, None] + b[None, None, :, None]

    def gelu(v):
        return 0.5 * v * (1.0 + jax.lax.erf(v * _INV_SQRT2))

    def conv(v, w, b):
        out = jax.lax.conv_general_dilated(
            v, w, window_strides=(1, 1), padding="SAME",
            dimension_numbers=("NCHW", "OIHW", "NCHW"))
        return out + b[None, :, None, None]

    h = ln(x, params["ln1_gamma"], params["ln1_beta"])
    h = gelu(h)
    h = conv(h, params["w1"], params["b1"])
    h = ln(h, params["ln2_gamma"], params["ln2_beta"])
    h = gelu(h)
    h = conv(h, params["w2"], params["b2"])
    return h + x


if __name__ == "__main__":
    # ResNet(input_channel=4, output_channel=4, kernel=3, stride=1,
    #        num_features=16, dropout=0.1) on NCHW input (2, 4, 16, 16)
    B, C, H, W, K = 2, 4, 16, 16, 3
    key = jax.random.PRNGKey(0)
    kx, kp = jax.random.split(key)
    x = jax.random.normal(kx, (B, C, H, W), jnp.float32)
    params = init_params(kp, C, H, K)

    out = resnet_block(x, params)
    out = jax.block_until_ready(out)

    ref = resnet_ref(x, params)
    assert out.shape == (B, C, H, W) and out.dtype == jnp.float32
    if not np.allclose(np.asarray(out), np.asarray(ref), rtol=2e-3, atol=2e-3):
        raise AssertionError("Pallas kernel output does not match JAX reference")
    print("KERNEL_OK")
</pallas_src>

<mosaic_0001>
module attributes {stable_mosaic.version = 11 : i64} {
  func.func @_resnet_block_kernel(%arg0: i32, %arg1: memref<2x4x256xf32, #tpu.memory_space<vmem>>, %arg2: memref<1x256xf32, #tpu.memory_space<vmem>>, %arg3: memref<1x256xf32, #tpu.memory_space<vmem>>, %arg4: memref<4x36xf32, #tpu.memory_space<vmem>>, %arg5: memref<4x1xf32, #tpu.memory_space<vmem>>, %arg6: memref<1x256xf32, #tpu.memory_space<vmem>>, %arg7: memref<1x256xf32, #tpu.memory_space<vmem>>, %arg8: memref<4x36xf32, #tpu.memory_space<vmem>>, %arg9: memref<4x1xf32, #tpu.memory_space<vmem>>, %arg10: memref<2x4x256xf32, #tpu.memory_space<vmem>>, %arg11: memref<4x290xf32, #tpu.memory_space<vmem>>, %arg12: memref<36x256xf32, #tpu.memory_space<vmem>>) attributes {dimension_semantics = [#tpu.dimension_semantics<arbitrary>], iteration_bounds = array<i64: 1>, scalar_prefetch = 0 : i64, scratch_operands = 2 : i64, tpu.core_type = #tpu.core_type<tc>, window_params = [{pipeline_mode = #tpu.pipeline_mode<synchronous>, transform_indices = @transform_0, window_bounds = array<i64: 2, 4, 256>}, {pipeline_mode = #tpu.pipeline_mode<synchronous>, transform_indices = @transform_1, window_bounds = array<i64: 1, 256>}, {pipeline_mode = #tpu.pipeline_mode<synchronous>, transform_indices = @transform_2, window_bounds = array<i64: 1, 256>}, {pipeline_mode = #tpu.pipeline_mode<synchronous>, transform_indices = @transform_3, window_bounds = array<i64: 4, 36>}, {pipeline_mode = #tpu.pipeline_mode<synchronous>, transform_indices = @transform_4, window_bounds = array<i64: 4, 1>}, {pipeline_mode = #tpu.pipeline_mode<synchronous>, transform_indices = @transform_5, window_bounds = array<i64: 1, 256>}, {pipeline_mode = #tpu.pipeline_mode<synchronous>, transform_indices = @transform_6, window_bounds = array<i64: 1, 256>}, {pipeline_mode = #tpu.pipeline_mode<synchronous>, transform_indices = @transform_7, window_bounds = array<i64: 4, 36>}, {pipeline_mode = #tpu.pipeline_mode<synchronous>, transform_indices = @transform_8, window_bounds = array<i64: 4, 1>}, {pipeline_mode = #tpu.pipeline_mode<synchronous>, transform_indices = @transform_9, window_bounds = array<i64: 2, 4, 256>}]} {
    %0 = tpu.iota {dimensions = array<i32: 1>} : vector<1x256xi32>
    %c16_i32 = arith.constant 16 : i32
    %c0_i32 = arith.constant 0 : i32
    %1 = arith.cmpi eq, %c16_i32, %c0_i32 : i32
    %c1_i32 = arith.constant 1 : i32
    %2 = arith.select %1, %c1_i32, %c16_i32 : i32
    %3 = vector.broadcast %2 : i32 to vector<1x256xi32>
    %4 = arith.remsi %0, %3 : vector<1x256xi32>
    %c0_i32_0 = arith.constant 0 : i32
    %5 = vector.broadcast %c0_i32_0 : i32 to vector<1x256xi32>
    %6 = arith.cmpi ne, %4, %5 : vector<1x256xi32>
    %c0_i32_1 = arith.constant 0 : i32
    %7 = vector.broadcast %c0_i32_1 : i32 to vector<1x256xi32>
    %8 = arith.cmpi slt, %4, %7 : vector<1x256xi32>
    %c0_i32_2 = arith.constant 0 : i32
    %9 = arith.cmpi slt, %2, %c0_i32_2 : i32
    %10 = vector.broadcast %9 : i1 to vector<1x256xi1>
    %11 = vector.broadcast %10 : vector<1x256xi1> to vector<1x256xi1>
    %12 = arith.xori %8, %11 : vector<1x256xi1>
    %13 = arith.andi %12, %6 : vector<1x256xi1>
    %14 = vector.broadcast %2 : i32 to vector<1x256xi32>
    %15 = arith.addi %4, %14 : vector<1x256xi32>
    %16 = arith.select %13, %15, %4 : vector<1x256xi1>, vector<1x256xi32>
    %c-1_i32 = arith.constant -1 : i32
    %17 = vector.broadcast %c-1_i32 : i32 to vector<1x256xi32>
    %18 = arith.addi %16, %17 : vector<1x256xi32>
    %c0_i32_3 = arith.constant 0 : i32
    %19 = vector.broadcast %c0_i32_3 : i32 to vector<1x256xi32>
    %20 = arith.cmpi sge, %18, %19 : vector<1x256xi32>
    %c-1_i32_4 = arith.constant -1 : i32
    %21 = vector.broadcast %c-1_i32_4 : i32 to vector<1x256xi32>
    %22 = arith.addi %16, %21 : vector<1x256xi32>
    %c16_i32_5 = arith.constant 16 : i32
    %23 = vector.broadcast %c16_i32_5 : i32 to vector<1x256xi32>
    %24 = arith.cmpi slt, %22, %23 : vector<1x256xi32>
    %25 = arith.andi %20, %24 : vector<1x256xi1>
    %c1_i32_6 = arith.constant 1 : i32
    %26 = vector.broadcast %c1_i32_6 : i32 to vector<1x256xi32>
    %27 = arith.addi %16, %26 : vector<1x256xi32>
    %c0_i32_7 = arith.constant 0 : i32
    %28 = vector.broadcast %c0_i32_7 : i32 to vector<1x256xi32>
    %29 = arith.cmpi sge, %27, %28 : vector<1x256xi32>
    %c1_i32_8 = arith.constant 1 : i32
    %30 = vector.broadcast %c1_i32_8 : i32 to vector<1x256xi32>
    %31 = arith.addi %16, %30 : vector<1x256xi32>
    %c16_i32_9 = arith.constant 16 : i32
    %32 = vector.broadcast %c16_i32_9 : i32 to vector<1x256xi32>
    %33 = arith.cmpi slt, %31, %32 : vector<1x256xi32>
    %34 = arith.andi %29, %33 : vector<1x256xi1>
    %cst = arith.constant 0.000000e+00 : f32
    %35 = vector.broadcast %cst : f32 to vector<4x290xf32>
    %c0 = arith.constant 0 : index
    %c0_10 = arith.constant 0 : index
    %36 = vector.load %arg11[%c0, %c0_10] : memref<4x290xf32, #tpu.memory_space<vmem>>, vector<4x290xf32>
    tpu.vector_store %arg11[%c0, %c0_10], %35 {strides = array<i32>} : memref<4x290xf32, #tpu.memory_space<vmem>>, vector<4x290xf32>,
    %c0_11 = arith.constant 0 : index
    %c0_12 = arith.constant 0 : index
    %c0_13 = arith.constant 0 : index
    %37 = vector.load %arg1[%c0_11, %c0_12, %c0_13] : memref<2x4x256xf32, #tpu.memory_space<vmem>>, vector<1x4x256xf32>
    %38 = vector.shape_cast %37 : vector<1x4x256xf32> to vector<4x256xf32>
    %c16_i32_14 = arith.constant 16 : i32
    %39 = tpu.dynamic_rotate %38 by %c16_i32_14 dim 1 : vector<4x256xf32>, i32 -> vector<4x256xf32>
    %40 = arith.addf %38, %39 : vector<4x256xf32>
    %c32_i32 = arith.constant 32 : i32
    %41 = tpu.dynamic_rotate %40 by %c32_i32 dim 1 : vector<4x256xf32>, i32 -> vector<4x256xf32>
    %42 = arith.addf %40, %41 : vector<4x256xf32>
    %c64_i32 = arith.constant 64 : i32
    %43 = tpu.dynamic_rotate %42 by %c64_i32 dim 1 : vector<4x256xf32>, i32 -> vector<4x256xf32>
    %44 = arith.addf %42, %43 : vector<4x256xf32>
    %c128_i32 = arith.constant 128 : i32
    %45 = tpu.dynamic_rotate %44 by %c128_i32 dim 1 : vector<4x256xf32>, i32 -> vector<4x256xf32>
    %46 = arith.addf %44, %45 : vector<4x256xf32>
    %cst_15 = arith.constant 6.250000e-02 : f32
    %47 = vector.broadcast %cst_15 : f32 to vector<4x256xf32>
    %48 = arith.mulf %46, %47 : vector<4x256xf32>
    %49 = arith.subf %38, %48 : vector<4x256xf32>
    %50 = arith.mulf %49, %49 : vector<4x256xf32>
    %c16_i32_16 = arith.constant 16 : i32
    %51 = tpu.dynamic_rotate %50 by %c16_i32_16 dim 1 : vector<4x256xf32>, i32 -> vector<4x256xf32>
    %52 = arith.addf %50, %51 : vector<4x256xf32>
    %c32_i32_17 = arith.constant 32 : i32
    %53 = tpu.dynamic_rotate %52 by %c32_i32_17 dim 1 : vector<4x256xf32>, i32 -> vector<4x256xf32>
    %54 = arith.addf %52, %53 : vector<4x256xf32>
    %c64_i32_18 = arith.constant 64 : i32
    %55 = tpu.dynamic_rotate %54 by %c64_i32_18 dim 1 : vector<4x256xf32>, i32 -> vector<4x256xf32>
    %56 = arith.addf %54, %55 : vector<4x256xf32>
    %c128_i32_19 = arith.constant 128 : i32
    %57 = tpu.dynamic_rotate %56 by %c128_i32_19 dim 1 : vector<4x256xf32>, i32 -> vector<4x256xf32>
    %58 = arith.addf %56, %57 : vector<4x256xf32>
    %cst_20 = arith.constant 6.250000e-02 : f32
    %59 = vector.broadcast %cst_20 : f32 to vector<4x256xf32>
    %60 = arith.mulf %58, %59 : vector<4x256xf32>
    %cst_21 = arith.constant 9.99999974E-6 : f32
    %61 = vector.broadcast %cst_21 : f32 to vector<4x256xf32>
    %62 = arith.addf %60, %61 : vector<4x256xf32>
    %63 = math.rsqrt %62 : vector<4x256xf32>
    %64 = arith.mulf %49, %63 : vector<4x256xf32>
    %c0_22 = arith.constant 0 : index
    %c0_23 = arith.constant 0 : index
    %65 = vector.load %arg2[%c0_22, %c0_23] : memref<1x256xf32, #tpu.memory_space<vmem>>, vector<1x256xf32>
    %66 = vector.broadcast %65 : vector<1x256xf32> to vector<4x256xf32>
    %67 = arith.mulf %64, %66 : vector<4x256xf32>
    %c0_24 = arith.constant 0 : index
    %c0_25 = arith.constant 0 : index
    %68 = vector.load %arg3[%c0_24, %c0_25] : memref<1x256xf32, #tpu.memory_space<vmem>>, vector<1x256xf32>
    %69 = vector.broadcast %68 : vector<1x256xf32> to vector<4x256xf32>
    %70 = arith.addf %67, %69 : vector<4x256xf32>
    %cst_26 = arith.constant 5.000000e-01 : f32
    %71 = vector.broadcast %cst_26 : f32 to vector<4x256xf32>
    %72 = arith.mulf %71, %70 : vector<4x256xf32>
    %cst_27 = arith.constant 0.707106769 : f32
    %73 = vector.broadcast %cst_27 : f32 to vector<4x256xf32>
    %74 = arith.mulf %70, %73 : vector<4x256xf32>
    %75 = math.erf %74 : vector<4x256xf32>
    %cst_28 = arith.constant 1.000000e+00 : f32
    %76 = vector.broadcast %cst_28 : f32 to vector<4x256xf32>
    %77 = arith.addf %76, %75 : vector<4x256xf32>
    %78 = arith.mulf %72, %77 : vector<4x256xf32>
    %c0_29 = arith.constant 0 : index
    %c17 = arith.constant 17 : index
    %79 = vector.load %arg11[%c0_29, %c17] : memref<4x290xf32, #tpu.memory_space<vmem>>, vector<4x256xf32>
    tpu.vector_store %arg11[%c0_29, %c17], %78 {strides = array<i32>} : memref<4x290xf32, #tpu.memory_space<vmem>>, vector<4x256xf32>,
    %c0_30 = arith.constant 0 : index
    %c0_31 = arith.constant 0 : index
    %80 = vector.load %arg11[%c0_30, %c0_31] : memref<4x290xf32, #tpu.memory_space<vmem>>, vector<4x256xf32>
    %cst_32 = arith.constant 0.000000e+00 : f32
    %81 = vector.shape_cast %25 : vector<1x256xi1> to vector<1x256xi1>
    %82 = vector.broadcast %81 : vector<1x256xi1> to vector<4x256xi1>
    %83 = vector.broadcast %cst_32 : f32 to vector<4x256xf32>
    %84 = arith.select %82, %80, %83 : vector<4x256xi1>, vector<4x256xf32>
    %c0_33 = arith.constant 0 : index
    %c0_34 = arith.constant 0 : index
    %85 = vector.load %arg12[%c0_33, %c0_34] : memref<36x256xf32, #tpu.memory_space<vmem>>, vector<4x256xf32>
    tpu.vector_store %arg12[%c0_33, %c0_34], %84 {strides = array<i32>} : memref<36x256xf32, #tpu.memory_space<vmem>>, vector<4x256xf32>,
    %c0_35 = arith.constant 0 : index
    %c1 = arith.constant 1 : index
    %86 = vector.load %arg11[%c0_35, %c1] : memref<4x290xf32, #tpu.memory_space<vmem>>, vector<4x256xf32>
    %c4 = arith.constant 4 : index
    %c0_36 = arith.constant 0 : index
    %87 = vector.load %arg12[%c4, %c0_36] : memref<36x256xf32, #tpu.memory_space<vmem>>, vector<4x256xf32>
    tpu.vector_store %arg12[%c4, %c0_36], %86 {strides = array<i32>} : memref<36x256xf32, #tpu.memory_space<vmem>>, vector<4x256xf32>,
    %c0_37 = arith.constant 0 : index
    %c2 = arith.constant 2 : index
    %88 = vector.load %arg11[%c0_37, %c2] : memref<4x290xf32, #tpu.memory_space<vmem>>, vector<4x256xf32>
    %cst_38 = arith.constant 0.000000e+00 : f32
    %89 = vector.shape_cast %34 : vector<1x256xi1> to vector<1x256xi1>
    %90 = vector.broadcast %89 : vector<1x256xi1> to vector<4x256xi1>
    %91 = vector.broadcast %cst_38 : f32 to vector<4x256xf32>
    %92 = arith.select %90, %88, %91 : vector<4x256xi1>, vector<4x256xf32>
    %c8 = arith.constant 8 : index
    %c0_39 = arith.constant 0 : index
    %93 = vector.load %arg12[%c8, %c0_39] : memref<36x256xf32, #tpu.memory_space<vmem>>, vector<4x256xf32>
    tpu.vector_store %arg12[%c8, %c0_39], %92 {strides = array<i32>} : memref<36x256xf32, #tpu.memory_space<vmem>>, vector<4x256xf32>,
    %c0_40 = arith.constant 0 : index
    %c16 = arith.constant 16 : index
    %94 = vector.load %arg11[%c0_40, %c16] : memref<4x290xf32, #tpu.memory_space<vmem>>, vector<4x256xf32>
    %cst_41 = arith.constant 0.000000e+00 : f32
    %95 = vector.shape_cast %25 : vector<1x256xi1> to vector<1x256xi1>
    %96 = vector.broadcast %95 : vector<1x256xi1> to vector<4x256xi1>
    %97 = vector.broadcast %cst_41 : f32 to vector<4x256xf32>
    %98 = arith.select %96, %94, %97 : vector<4x256xi1>, vector<4x256xf32>
    %c12 = arith.constant 12 : index
    %c0_42 = arith.constant 0 : index
    %99 = vector.load %arg12[%c12, %c0_42] : memref<36x256xf32, #tpu.memory_space<vmem>>, vector<4x256xf32>
    tpu.vector_store %arg12[%c12, %c0_42], %98 {strides = array<i32>} : memref<36x256xf32, #tpu.memory_space<vmem>>, vector<4x256xf32>,
    %c0_43 = arith.constant 0 : index
    %c17_44 = arith.constant 17 : index
    %100 = vector.load %arg11[%c0_43, %c17_44] : memref<4x290xf32, #tpu.memory_space<vmem>>, vector<4x256xf32>
    %c16_45 = arith.constant 16 : index
    %c0_46 = arith.constant 0 : index
    %101 = vector.load %arg12[%c16_45, %c0_46] : memref<36x256xf32, #tpu.memory_space<vmem>>, vector<4x256xf32>
    tpu.vector_store %arg12[%c16_45, %c0_46], %100 {strides = array<i32>} : memref<36x256xf32, #tpu.memory_space<vmem>>, vector<4x256xf32>,
    %c0_47 = arith.constant 0 : index
    %c18 = arith.constant 18 : index
    %102 = vector.load %arg11[%c0_47, %c18] : memref<4x290xf32, #tpu.memory_space<vmem>>, vector<4x256xf32>
    %cst_48 = arith.constant 0.000000e+00 : f32
    %103 = vector.shape_cast %34 : vector<1x256xi1> to vector<1x256xi1>
    %104 = vector.broadcast %103 : vector<1x256xi1> to vector<4x256xi1>
    %105 = vector.broadcast %cst_48 : f32 to vector<4x256xf32>
    %106 = arith.select %104, %102, %105 : vector<4x256xi1>, vector<4x256xf32>
    %c20 = arith.constant 20 : index
    %c0_49 = arith.constant 0 : index
    %107 = vector.load %arg12[%c20, %c0_49] : memref<36x256xf32, #tpu.memory_space<vmem>>, vector<4x256xf32>
    tpu.vector_store %arg12[%c20, %c0_49], %106 {strides = array<i32>} : memref<36x256xf32, #tpu.memory_space<vmem>>, vector<4x256xf32>,
    %c0_50 = arith.constant 0 : index
    %c32 = arith.constant 32 : index
    %108 = vector.load %arg11[%c0_50, %c32] : memref<4x290xf32, #tpu.memory_space<vmem>>, vector<4x256xf32>
    %cst_51 = arith.constant 0.000000e+00 : f32
    %109 = vector.shape_cast %25 : vector<1x256xi1> to vector<1x256xi1>
    %110 = vector.broadcast %109 : vector<1x256xi1> to vector<4x256xi1>
    %111 = vector.broadcast %cst_51 : f32 to vector<4x256xf32>
    %112 = arith.select %110, %108, %111 : vector<4x256xi1>, vector<4x256xf32>
    %c24 = arith.constant 24 : index
    %c0_52 = arith.constant 0 : index
    %113 = vector.load %arg12[%c24, %c0_52] : memref<36x256xf32, #tpu.memory_space<vmem>>, vector<4x256xf32>
    tpu.vector_store %arg12[%c24, %c0_52], %112 {strides = array<i32>} : memref<36x256xf32, #tpu.memory_space<vmem>>, vector<4x256xf32>,
    %c0_53 = arith.constant 0 : index
    %c33 = arith.constant 33 : index
    %114 = vector.load %arg11[%c0_53, %c33] : memref<4x290xf32, #tpu.memory_space<vmem>>, vector<4x256xf32>
    %c28 = arith.constant 28 : index
    %c0_54 = arith.constant 0 : index
    %115 = vector.load %arg12[%c28, %c0_54] : memref<36x256xf32, #tpu.memory_space<vmem>>, vector<4x256xf32>
    tpu.vector_store %arg12[%c28, %c0_54], %114 {strides = array<i32>} : memref<36x256xf32, #tpu.memory_space<vmem>>, vector<4x256xf32>,
    %c0_55 = arith.constant 0 : index
    %c34 = arith.constant 34 : index
    %116 = vector.load %arg11[%c0_55, %c34] : memref<4x290xf32, #tpu.memory_space<vmem>>, vector<4x256xf32>
    %cst_56 = arith.constant 0.000000e+00 : f32
    %117 = vector.shape_cast %34 : vector<1x256xi1> to vector<1x256xi1>
    %118 = vector.broadcast %117 : vector<1x256xi1> to vector<4x256xi1>
    %119 = vector.broadcast %cst_56 : f32 to vector<4x256xf32>
    %120 = arith.select %118, %116, %119 : vector<4x256xi1>, vector<4x256xf32>
    %c32_57 = arith.constant 32 : index
    %c0_58 = arith.constant 0 : index
    %121 = vector.load %arg12[%c32_57, %c0_58] : memref<36x256xf32, #tpu.memory_space<vmem>>, vector<4x256xf32>
    tpu.vector_store %arg12[%c32_57, %c0_58], %120 {strides = array<i32>} : memref<36x256xf32, #tpu.memory_space<vmem>>, vector<4x256xf32>,
    %c0_59 = arith.constant 0 : index
    %c0_60 = arith.constant 0 : index
    %122 = vector.load %arg4[%c0_59, %c0_60] : memref<4x36xf32, #tpu.memory_space<vmem>>, vector<4x36xf32>
    %c0_61 = arith.constant 0 : index
    %c0_62 = arith.constant 0 : index
    %123 = vector.load %arg12[%c0_61, %c0_62] : memref<36x256xf32, #tpu.memory_space<vmem>>, vector<36x256xf32>
    %cst_63 = arith.constant dense<0.000000e+00> : vector<4x256xf32>
    %124 = tpu.matmul %122, %123, %cst_63 {dimension_numbers = #tpu.dot_dimension_numbers<[1], [0], [0], [1], [0, 0, 1, 1], [], []>} : vector<4x36xf32>, vector<36x256xf32>, vector<4x256xf32> -> vector<4x256xf32>
    %c0_64 = arith.constant 0 : index
    %c0_65 = arith.constant 0 : index
    %125 = vector.load %arg5[%c0_64, %c0_65] : memref<4x1xf32, #tpu.memory_space<vmem>>, vector<4x1xf32>
    %126 = vector.broadcast %125 : vector<4x1xf32> to vector<4x256xf32>
    %127 = arith.addf %124, %126 : vector<4x256xf32>
    %c16_i32_66 = arith.constant 16 : i32
    %128 = tpu.dynamic_rotate %127 by %c16_i32_66 dim 1 : vector<4x256xf32>, i32 -> vector<4x256xf32>
    %129 = arith.addf %127, %128 : vector<4x256xf32>
    %c32_i32_67 = arith.constant 32 : i32
    %130 = tpu.dynamic_rotate %129 by %c32_i32_67 dim 1 : vector<4x256xf32>, i32 -> vector<4x256xf32>
    %131 = arith.addf %129, %130 : vector<4x256xf32>
    %c64_i32_68 = arith.constant 64 : i32
    %132 = tpu.dynamic_rotate %131 by %c64_i32_68 dim 1 : vector<4x256xf32>, i32 -> vector<4x256xf32>
    %133 = arith.addf %131, %132 : vector<4x256xf32>
    %c128_i32_69 = arith.constant 128 : i32
    %134 = tpu.dynamic_rotate %133 by %c128_i32_69 dim 1 : vector<4x256xf32>, i32 -> vector<4x256xf32>
    %135 = arith.addf %133, %134 : vector<4x256xf32>
    %cst_70 = arith.constant 6.250000e-02 : f32
    %136 = vector.broadcast %cst_70 : f32 to vector<4x256xf32>
    %137 = arith.mulf %135, %136 : vector<4x256xf32>
    %138 = arith.subf %127, %137 : vector<4x256xf32>
    %139 = arith.mulf %138, %138 : vector<4x256xf32>
    %c16_i32_71 = arith.constant 16 : i32
    %140 = tpu.dynamic_rotate %139 by %c16_i32_71 dim 1 : vector<4x256xf32>, i32 -> vector<4x256xf32>
    %141 = arith.addf %139, %140 : vector<4x256xf32>
    %c32_i32_72 = arith.constant 32 : i32
    %142 = tpu.dynamic_rotate %141 by %c32_i32_72 dim 1 : vector<4x256xf32>, i32 -> vector<4x256xf32>
    %143 = arith.addf %141, %142 : vector<4x256xf32>
    %c64_i32_73 = arith.constant 64 : i32
    %144 = tpu.dynamic_rotate %143 by %c64_i32_73 dim 1 : vector<4x256xf32>, i32 -> vector<4x256xf32>
    %145 = arith.addf %143, %144 : vector<4x256xf32>
    %c128_i32_74 = arith.constant 128 : i32
    %146 = tpu.dynamic_rotate %145 by %c128_i32_74 dim 1 : vector<4x256xf32>, i32 -> vector<4x256xf32>
    %147 = arith.addf %145, %146 : vector<4x256xf32>
    %cst_75 = arith.constant 6.250000e-02 : f32
    %148 = vector.broadcast %cst_75 : f32 to vector<4x256xf32>
    %149 = arith.mulf %147, %148 : vector<4x256xf32>
    %cst_76 = arith.constant 9.99999974E-6 : f32
    %150 = vector.broadcast %cst_76 : f32 to vector<4x256xf32>
    %151 = arith.addf %149, %150 : vector<4x256xf32>
    %152 = math.rsqrt %151 : vector<4x256xf32>
    %153 = arith.mulf %138, %152 : vector<4x256xf32>
    %c0_77 = arith.constant 0 : index
    %c0_78 = arith.constant 0 : index
    %154 = vector.load %arg6[%c0_77, %c0_78] : memref<1x256xf32, #tpu.memory_space<vmem>>, vector<1x256xf32>
    %155 = vector.broadcast %154 : vector<1x256xf32> to vector<4x256xf32>
    %156 = arith.mulf %153, %155 : vector<4x256xf32>
    %c0_79 = arith.constant 0 : index
    %c0_80 = arith.constant 0 : index
    %157 = vector.load %arg7[%c0_79, %c0_80] : memref<1x256xf32, #tpu.memory_space<vmem>>, vector<1x256xf32>
    %158 = vector.broadcast %157 : vector<1x256xf32> to vector<4x256xf32>
    %159 = arith.addf %156, %158 : vector<4x256xf32>
    %cst_81 = arith.constant 5.000000e-01 : f32
    %160 = vector.broadcast %cst_81 : f32 to vector<4x256xf32>
    %161 = arith.mulf %160, %159 : vector<4x256xf32>
    %cst_82 = arith.constant 0.707106769 : f32
    %162 = vector.broadcast %cst_82 : f32 to vector<4x256xf32>
    %163 = arith.mulf %159, %162 : vector<4x256xf32>
    %164 = math.erf %163 : vector<4x256xf32>
    %cst_83 = arith.constant 1.000000e+00 : f32
    %165 = vector.broadcast %cst_83 : f32 to vector<4x256xf32>
    %166 = arith.addf %165, %164 : vector<4x256xf32>
    %167 = arith.mulf %161, %166 : vector<4x256xf32>
    %c0_84 = arith.constant 0 : index
    %c17_85 = arith.constant 17 : index
    %168 = vector.load %arg11[%c0_84, %c17_85] : memref<4x290xf32, #tpu.memory_space<vmem>>, vector<4x256xf32>
    tpu.vector_store %arg11[%c0_84, %c17_85], %167 {strides = array<i32>} : memref<4x290xf32, #tpu.memory_space<vmem>>, vector<4x256xf32>,
    %c0_86 = arith.constant 0 : index
    %c0_87 = arith.constant 0 : index
    %169 = vector.load %arg11[%c0_86, %c0_87] : memref<4x290xf32, #tpu.memory_space<vmem>>, vector<4x256xf32>
    %cst_88 = arith.constant 0.000000e+00 : f32
    %170 = vector.shape_cast %25 : vector<1x256xi1> to vector<1x256xi1>
    %171 = vector.broadcast %170 : vector<1x256xi1> to vector<4x256xi1>
    %172 = vector.broadcast %cst_88 : f32 to vector<4x256xf32>
    %173 = arith.select %171, %169, %172 : vector<4x256xi1>, vector<4x256xf32>
    %c0_89 = arith.constant 0 : index
    %c0_90 = arith.constant 0 : index
    %174 = vector.load %arg12[%c0_89, %c0_90] : memref<36x256xf32, #tpu.memory_space<vmem>>, vector<4x256xf32>
    tpu.vector_store %arg12[%c0_89, %c0_90], %173 {strides = array<i32>} : memref<36x256xf32, #tpu.memory_space<vmem>>, vector<4x256xf32>,
    %c0_91 = arith.constant 0 : index
    %c1_92 = arith.constant 1 : index
    %175 = vector.load %arg11[%c0_91, %c1_92] : memref<4x290xf32, #tpu.memory_space<vmem>>, vector<4x256xf32>
    %c4_93 = arith.constant 4 : index
    %c0_94 = arith.constant 0 : index
    %176 = vector.load %arg12[%c4_93, %c0_94] : memref<36x256xf32, #tpu.memory_space<vmem>>, vector<4x256xf32>
    tpu.vector_store %arg12[%c4_93, %c0_94], %175 {strides = array<i32>} : memref<36x256xf32, #tpu.memory_space<vmem>>, vector<4x256xf32>,
    %c0_95 = arith.constant 0 : index
    %c2_96 = arith.constant 2 : index
    %177 = vector.load %arg11[%c0_95, %c2_96] : memref<4x290xf32, #tpu.memory_space<vmem>>, vector<4x256xf32>
    %cst_97 = arith.constant 0.000000e+00 : f32
    %178 = vector.shape_cast %34 : vector<1x256xi1> to vector<1x256xi1>
    %179 = vector.broadcast %178 : vector<1x256xi1> to vector<4x256xi1>
    %180 = vector.broadcast %cst_97 : f32 to vector<4x256xf32>
    %181 = arith.select %179, %177, %180 : vector<4x256xi1>, vector<4x256xf32>
    %c8_98 = arith.constant 8 : index
    %c0_99 = arith.constant 0 : index
    %182 = vector.load %arg12[%c8_98, %c0_99] : memref<36x256xf32, #tpu.memory_space<vmem>>, vector<4x256xf32>
    tpu.vector_store %arg12[%c8_98, %c0_99], %181 {strides = array<i32>} : memref<36x256xf32, #tpu.memory_space<vmem>>, vector<4x256xf32>,
    %c0_100 = arith.constant 0 : index
    %c16_101 = arith.constant 16 : index
    %183 = vector.load %arg11[%c0_100, %c16_101] : memref<4x290xf32, #tpu.memory_space<vmem>>, vector<4x256xf32>
    %cst_102 = arith.constant 0.000000e+00 : f32
    %184 = vector.shape_cast %25 : vector<1x256xi1> to vector<1x256xi1>
    %185 = vector.broadcast %184 : vector<1x256xi1> to vector<4x256xi1>
    %186 = vector.broadcast %cst_102 : f32 to vector<4x256xf32>
    %187 = arith.select %185, %183, %186 : vector<4x256xi1>, vector<4x256xf32>
    %c12_103 = arith.constant 12 : index
    %c0_104 = arith.constant 0 : index
    %188 = vector.load %arg12[%c12_103, %c0_104] : memref<36x256xf32, #tpu.memory_space<vmem>>, vector<4x256xf32>
    tpu.vector_store %arg12[%c12_103, %c0_104], %187 {strides = array<i32>} : memref<36x256xf32, #tpu.memory_space<vmem>>, vector<4x256xf32>,
    %c0_105 = arith.constant 0 : index
    %c17_106 = arith.constant 17 : index
    %189 = vector.load %arg11[%c0_105, %c17_106] : memref<4x290xf32, #tpu.memory_space<vmem>>, vector<4x256xf32>
    %c16_107 = arith.constant 16 : index
    %c0_108 = arith.constant 0 : index
    %190 = vector.load %arg12[%c16_107, %c0_108] : memref<36x256xf32, #tpu.memory_space<vmem>>, vector<4x256xf32>
    tpu.vector_store %arg12[%c16_107, %c0_108], %189 {strides = array<i32>} : memref<36x256xf32, #tpu.memory_space<vmem>>, vector<4x256xf32>,
    %c0_109 = arith.constant 0 : index
    %c18_110 = arith.constant 18 : index
    %191 = vector.load %arg11[%c0_109, %c18_110] : memref<4x290xf32, #tpu.memory_space<vmem>>, vector<4x256xf32>
    %cst_111 = arith.constant 0.000000e+00 : f32
    %192 = vector.shape_cast %34 : vector<1x256xi1> to vector<1x256xi1>
    %193 = vector.broadcast %192 : vector<1x256xi1> to vector<4x256xi1>
    %194 = vector.broadcast %cst_111 : f32 to vector<4x256xf32>
    %195 = arith.select %193, %191, %194 : vector<4x256xi1>, vector<4x256xf32>
    %c20_112 = arith.constant 20 : index
    %c0_113 = arith.constant 0 : index
    %196 = vector.load %arg12[%c20_112, %c0_113] : memref<36x256xf32, #tpu.memory_space<vmem>>, vector<4x256xf32>
    tpu.vector_store %arg12[%c20_112, %c0_113], %195 {strides = array<i32>} : memref<36x256xf32, #tpu.memory_space<vmem>>, vector<4x256xf32>,
    %c0_114 = arith.constant 0 : index
    %c32_115 = arith.constant 32 : index
    %197 = vector.load %arg11[%c0_114, %c32_115] : memref<4x290xf32, #tpu.memory_space<vmem>>, vector<4x256xf32>
    %cst_116 = arith.constant 0.000000e+00 : f32
    %198 = vector.shape_cast %25 : vector<1x256xi1> to vector<1x256xi1>
    %199 = vector.broadcast %198 : vector<1x256xi1> to vector<4x256xi1>
    %200 = vector.broadcast %cst_116 : f32 to vector<4x256xf32>
    %201 = arith.select %199, %197, %200 : vector<4x256xi1>, vector<4x256xf32>
    %c24_117 = arith.constant 24 : index
    %c0_118 = arith.constant 0 : index
    %202 = vector.load %arg12[%c24_117, %c0_118] : memref<36x256xf32, #tpu.memory_space<vmem>>, vector<4x256xf32>
    tpu.vector_store %arg12[%c24_117, %c0_118], %201 {strides = array<i32>} : memref<36x256xf32, #tpu.memory_space<vmem>>, vector<4x256xf32>,
    %c0_119 = arith.constant 0 : index
    %c33_120 = arith.constant 33 : index
    %203 = vector.load %arg11[%c0_119, %c33_120] : memref<4x290xf32, #tpu.memory_space<vmem>>, vector<4x256xf32>
    %c28_121 = arith.constant 28 : index
    %c0_122 = arith.constant 0 : index
    %204 = vector.load %arg12[%c28_121, %c0_122] : memref<36x256xf32, #tpu.memory_space<vmem>>, vector<4x256xf32>
    tpu.vector_store %arg12[%c28_121, %c0_122], %203 {strides = array<i32>} : memref<36x256xf32, #tpu.memory_space<vmem>>, vector<4x256xf32>,
    %c0_123 = arith.constant 0 : index
    %c34_124 = arith.constant 34 : index
    %205 = vector.load %arg11[%c0_123, %c34_124] : memref<4x290xf32, #tpu.memory_space<vmem>>, vector<4x256xf32>
    %cst_125 = arith.constant 0.000000e+00 : f32
    %206 = vector.shape_cast %34 : vector<1x256xi1> to vector<1x256xi1>
    %207 = vector.broadcast %206 : vector<1x256xi1> to vector<4x256xi1>
    %208 = vector.broadcast %cst_125 : f32 to vector<4x256xf32>
    %209 = arith.select %207, %205, %208 : vector<4x256xi1>, vector<4x256xf32>
    %c32_126 = arith.constant 32 : index
    %c0_127 = arith.constant 0 : index
    %210 = vector.load %arg12[%c32_126, %c0_127] : memref<36x256xf32, #tpu.memory_space<vmem>>, vector<4x256xf32>
    tpu.vector_store %arg12[%c32_126, %c0_127], %209 {strides = array<i32>} : memref<36x256xf32, #tpu.memory_space<vmem>>, vector<4x256xf32>,
    %c0_128 = arith.constant 0 : index
    %c0_129 = arith.constant 0 : index
    %211 = vector.load %arg8[%c0_128, %c0_129] : memref<4x36xf32, #tpu.memory_space<vmem>>, vector<4x36xf32>
    %c0_130 = arith.constant 0 : index
    %c0_131 = arith.constant 0 : index
    %212 = vector.load %arg12[%c0_130, %c0_131] : memref<36x256xf32, #tpu.memory_space<vmem>>, vector<36x256xf32>
    %cst_132 = arith.constant dense<0.000000e+00> : vector<4x256xf32>
    %213 = tpu.matmul %211, %212, %cst_132 {dimension_numbers = #tpu.dot_dimension_numbers<[1], [0], [0], [1], [0, 0, 1, 1], [], []>} : vector<4x36xf32>, vector<36x256xf32>, vector<4x256xf32> -> vector<4x256xf32>
    %c0_133 = arith.constant 0 : index
    %c0_134 = arith.constant 0 : index
    %214 = vector.load %arg9[%c0_133, %c0_134] : memref<4x1xf32, #tpu.memory_space<vmem>>, vector<4x1xf32>
    %215 = vector.broadcast %214 : vector<4x1xf32> to vector<4x256xf32>
    %216 = arith.addf %213, %215 : vector<4x256xf32>
    %217 = arith.addf %216, %38 : vector<4x256xf32>
    %c0_135 = arith.constant 0 : index
    %c0_136 = arith.constant 0 : index
    %c0_137 = arith.constant 0 : index
    %218 = vector.load %arg10[%c0_135, %c0_136, %c0_137] : memref<2x4x256xf32, #tpu.memory_space<vmem>>, vector<1x4x256xf32>
    %219 = vector.shape_cast %218 : vector<1x4x256xf32> to vector<4x256xf32>
    %220 = vector.shape_cast %217 : vector<4x256xf32> to vector<1x4x256xf32>
    tpu.vector_store %arg10[%c0_135, %c0_136, %c0_137], %220 {strides = array<i32>} : memref<2x4x256xf32, #tpu.memory_space<vmem>>, vector<1x4x256xf32>,
    %c1_138 = arith.constant 1 : index
    %c0_139 = arith.constant 0 : index
    %c0_140 = arith.constant 0 : index
    %221 = vector.load %arg1[%c1_138, %c0_139, %c0_140] : memref<2x4x256xf32, #tpu.memory_space<vmem>>, vector<1x4x256xf32>
    %222 = vector.shape_cast %221 : vector<1x4x256xf32> to vector<4x256xf32>
    %c16_i32_141 = arith.constant 16 : i32
    %223 = tpu.dynamic_rotate %222 by %c16_i32_141 dim 1 : vector<4x256xf32>, i32 -> vector<4x256xf32>
    %224 = arith.addf %222, %223 : vector<4x256xf32>
    %c32_i32_142 = arith.constant 32 : i32
    %225 = tpu.dynamic_rotate %224 by %c32_i32_142 dim 1 : vector<4x256xf32>, i32 -> vector<4x256xf32>
    %226 = arith.addf %224, %225 : vector<4x256xf32>
    %c64_i32_143 = arith.constant 64 : i32
    %227 = tpu.dynamic_rotate %226 by %c64_i32_143 dim 1 : vector<4x256xf32>, i32 -> vector<4x256xf32>
    %228 = arith.addf %226, %227 : vector<4x256xf32>
    %c128_i32_144 = arith.constant 128 : i32
    %229 = tpu.dynamic_rotate %228 by %c128_i32_144 dim 1 : vector<4x256xf32>, i32 -> vector<4x256xf32>
    %230 = arith.addf %228, %229 : vector<4x256xf32>
    %cst_145 = arith.constant 6.250000e-02 : f32
    %231 = vector.broadcast %cst_145 : f32 to vector<4x256xf32>
    %232 = arith.mulf %230, %231 : vector<4x256xf32>
    %233 = arith.subf %222, %232 : vector<4x256xf32>
    %234 = arith.mulf %233, %233 : vector<4x256xf32>
    %c16_i32_146 = arith.constant 16 : i32
    %235 = tpu.dynamic_rotate %234 by %c16_i32_146 dim 1 : vector<4x256xf32>, i32 -> vector<4x256xf32>
    %236 = arith.addf %234, %235 : vector<4x256xf32>
    %c32_i32_147 = arith.constant 32 : i32
    %237 = tpu.dynamic_rotate %236 by %c32_i32_147 dim 1 : vector<4x256xf32>, i32 -> vector<4x256xf32>
    %238 = arith.addf %236, %237 : vector<4x256xf32>
    %c64_i32_148 = arith.constant 64 : i32
    %239 = tpu.dynamic_rotate %238 by %c64_i32_148 dim 1 : vector<4x256xf32>, i32 -> vector<4x256xf32>
    %240 = arith.addf %238, %239 : vector<4x256xf32>
    %c128_i32_149 = arith.constant 128 : i32
    %241 = tpu.dynamic_rotate %240 by %c128_i32_149 dim 1 : vector<4x256xf32>, i32 -> vector<4x256xf32>
    %242 = arith.addf %240, %241 : vector<4x256xf32>
    %cst_150 = arith.constant 6.250000e-02 : f32
    %243 = vector.broadcast %cst_150 : f32 to vector<4x256xf32>
    %244 = arith.mulf %242, %243 : vector<4x256xf32>
    %cst_151 = arith.constant 9.99999974E-6 : f32
    %245 = vector.broadcast %cst_151 : f32 to vector<4x256xf32>
    %246 = arith.addf %244, %245 : vector<4x256xf32>
    %247 = math.rsqrt %246 : vector<4x256xf32>
    %248 = arith.mulf %233, %247 : vector<4x256xf32>
    %c0_152 = arith.constant 0 : index
    %c0_153 = arith.constant 0 : index
    %249 = vector.load %arg2[%c0_152, %c0_153] : memref<1x256xf32, #tpu.memory_space<vmem>>, vector<1x256xf32>
    %250 = vector.broadcast %249 : vector<1x256xf32> to vector<4x256xf32>
    %251 = arith.mulf %248, %250 : vector<4x256xf32>
    %c0_154 = arith.constant 0 : index
    %c0_155 = arith.constant 0 : index
    %252 = vector.load %arg3[%c0_154, %c0_155] : memref<1x256xf32, #tpu.memory_space<vmem>>, vector<1x256xf32>
    %253 = vector.broadcast %252 : vector<1x256xf32> to vector<4x256xf32>
    %254 = arith.addf %251, %253 : vector<4x256xf32>
    %cst_156 = arith.constant 5.000000e-01 : f32
    %255 = vector.broadcast %cst_156 : f32 to vector<4x256xf32>
    %256 = arith.mulf %255, %254 : vector<4x256xf32>
    %cst_157 = arith.constant 0.707106769 : f32
    %257 = vector.broadcast %cst_157 : f32 to vector<4x256xf32>
    %258 = arith.mulf %254, %257 : vector<4x256xf32>
    %259 = math.erf %258 : vector<4x256xf32>
    %cst_158 = arith.constant 1.000000e+00 : f32
    %260 = vector.broadcast %cst_158 : f32 to vector<4x256xf32>
    %261 = arith.addf %260, %259 : vector<4x256xf32>
    %262 = arith.mulf %256, %261 : vector<4x256xf32>
    %c0_159 = arith.constant 0 : index
    %c17_160 = arith.constant 17 : index
    %263 = vector.load %arg11[%c0_159, %c17_160] : memref<4x290xf32, #tpu.memory_space<vmem>>, vector<4x256xf32>
    tpu.vector_store %arg11[%c0_159, %c17_160], %262 {strides = array<i32>} : memref<4x290xf32, #tpu.memory_space<vmem>>, vector<4x256xf32>,
    %c0_161 = arith.constant 0 : index
    %c0_162 = arith.constant 0 : index
    %264 = vector.load %arg11[%c0_161, %c0_162] : memref<4x290xf32, #tpu.memory_space<vmem>>, vector<4x256xf32>
    %cst_163 = arith.constant 0.000000e+00 : f32
    %265 = vector.shape_cast %25 : vector<1x256xi1> to vector<1x256xi1>
    %266 = vector.broadcast %265 : vector<1x256xi1> to vector<4x256xi1>
    %267 = vector.broadcast %cst_163 : f32 to vector<4x256xf32>
    %268 = arith.select %266, %264, %267 : vector<4x256xi1>, vector<4x256xf32>
    %c0_164 = arith.constant 0 : index
    %c0_165 = arith.constant 0 : index
    %269 = vector.load %arg12[%c0_164, %c0_165] : memref<36x256xf32, #tpu.memory_space<vmem>>, vector<4x256xf32>
    tpu.vector_store %arg12[%c0_164, %c0_165], %268 {strides = array<i32>} : memref<36x256xf32, #tpu.memory_space<vmem>>, vector<4x256xf32>,
    %c0_166 = arith.constant 0 : index
    %c1_167 = arith.constant 1 : index
    %270 = vector.load %arg11[%c0_166, %c1_167] : memref<4x290xf32, #tpu.memory_space<vmem>>, vector<4x256xf32>
    %c4_168 = arith.constant 4 : index
    %c0_169 = arith.constant 0 : index
    %271 = vector.load %arg12[%c4_168, %c0_169] : memref<36x256xf32, #tpu.memory_space<vmem>>, vector<4x256xf32>
    tpu.vector_store %arg12[%c4_168, %c0_169], %270 {strides = array<i32>} : memref<36x256xf32, #tpu.memory_space<vmem>>, vector<4x256xf32>,
    %c0_170 = arith.constant 0 : index
    %c2_171 = arith.constant 2 : index
    %272 = vector.load %arg11[%c0_170, %c2_171] : memref<4x290xf32, #tpu.memory_space<vmem>>, vector<4x256xf32>
    %cst_172 = arith.constant 0.000000e+00 : f32
    %273 = vector.shape_cast %34 : vector<1x256xi1> to vector<1x256xi1>
    %274 = vector.broadcast %273 : vector<1x256xi1> to vector<4x256xi1>
    %275 = vector.broadcast %cst_172 : f32 to vector<4x256xf32>
    %276 = arith.select %274, %272, %275 : vector<4x256xi1>, vector<4x256xf32>
    %c8_173 = arith.constant 8 : index
    %c0_174 = arith.constant 0 : index
    %277 = vector.load %arg12[%c8_173, %c0_174] : memref<36x256xf32, #tpu.memory_space<vmem>>, vector<4x256xf32>
    tpu.vector_store %arg12[%c8_173, %c0_174], %276 {strides = array<i32>} : memref<36x256xf32, #tpu.memory_space<vmem>>, vector<4x256xf32>,
    %c0_175 = arith.constant 0 : index
    %c16_176 = arith.constant 16 : index
    %278 = vector.load %arg11[%c0_175, %c16_176] : memref<4x290xf32, #tpu.memory_space<vmem>>, vector<4x256xf32>
    %cst_177 = arith.constant 0.000000e+00 : f32
    %279 = vector.shape_cast %25 : vector<1x256xi1> to vector<1x256xi1>
    %280 = vector.broadcast %279 : vector<1x256xi1> to vector<4x256xi1>
    %281 = vector.broadcast %cst_177 : f32 to vector<4x256xf32>
    %282 = arith.select %280, %278, %281 : vector<4x256xi1>, vector<4x256xf32>
    %c12_178 = arith.constant 12 : index
    %c0_179 = arith.constant 0 : index
    %283 = vector.load %arg12[%c12_178, %c0_179] : memref<36x256xf32, #tpu.memory_space<vmem>>, vector<4x256xf32>
    tpu.vector_store %arg12[%c12_178, %c0_179], %282 {strides = array<i32>} : memref<36x256xf32, #tpu.memory_space<vmem>>, vector<4x256xf32>,
    %c0_180 = arith.constant 0 : index
    %c17_181 = arith.constant 17 : index
    %284 = vector.load %arg11[%c0_180, %c17_181] : memref<4x290xf32, #tpu.memory_space<vmem>>, vector<4x256xf32>
    %c16_182 = arith.constant 16 : index
    %c0_183 = arith.constant 0 : index
    %285 = vector.load %arg12[%c16_182, %c0_183] : memref<36x256xf32, #tpu.memory_space<vmem>>, vector<4x256xf32>
    tpu.vector_store %arg12[%c16_182, %c0_183], %284 {strides = array<i32>} : memref<36x256xf32, #tpu.memory_space<vmem>>, vector<4x256xf32>,
    %c0_184 = arith.constant 0 : index
    %c18_185 = arith.constant 18 : index
    %286 = vector.load %arg11[%c0_184, %c18_185] : memref<4x290xf32, #tpu.memory_space<vmem>>, vector<4x256xf32>
    %cst_186 = arith.constant 0.000000e+00 : f32
    %287 = vector.shape_cast %34 : vector<1x256xi1> to vector<1x256xi1>
    %288 = vector.broadcast %287 : vector<1x256xi1> to vector<4x256xi1>
    %289 = vector.broadcast %cst_186 : f32 to vector<4x256xf32>
    %290 = arith.select %288, %286, %289 : vector<4x256xi1>, vector<4x256xf32>
    %c20_187 = arith.constant 20 : index
    %c0_188 = arith.constant 0 : index
    %291 = vector.load %arg12[%c20_187, %c0_188] : memref<36x256xf32, #tpu.memory_space<vmem>>, vector<4x256xf32>
    tpu.vector_store %arg12[%c20_187, %c0_188], %290 {strides = array<i32>} : memref<36x256xf32, #tpu.memory_space<vmem>>, vector<4x256xf32>,
    %c0_189 = arith.constant 0 : index
    %c32_190 = arith.constant 32 : index
    %292 = vector.load %arg11[%c0_189, %c32_190] : memref<4x290xf32, #tpu.memory_space<vmem>>, vector<4x256xf32>
    %cst_191 = arith.constant 0.000000e+00 : f32
    %293 = vector.shape_cast %25 : vector<1x256xi1> to vector<1x256xi1>
    %294 = vector.broadcast %293 : vector<1x256xi1> to vector<4x256xi1>
    %295 = vector.broadcast %cst_191 : f32 to vector<4x256xf32>
    %296 = arith.select %294, %292, %295 : vector<4x256xi1>, vector<4x256xf32>
    %c24_192 = arith.constant 24 : index
    %c0_193 = arith.constant 0 : index
    %297 = vector.load %arg12[%c24_192, %c0_193] : memref<36x256xf32, #tpu.memory_space<vmem>>, vector<4x256xf32>
    tpu.vector_store %arg12[%c24_192, %c0_193], %296 {strides = array<i32>} : memref<36x256xf32, #tpu.memory_space<vmem>>, vector<4x256xf32>,
    %c0_194 = arith.constant 0 : index
    %c33_195 = arith.constant 33 : index
    %298 = vector.load %arg11[%c0_194, %c33_195] : memref<4x290xf32, #tpu.memory_space<vmem>>, vector<4x256xf32>
    %c28_196 = arith.constant 28 : index
    %c0_197 = arith.constant 0 : index
    %299 = vector.load %arg12[%c28_196, %c0_197] : memref<36x256xf32, #tpu.memory_space<vmem>>, vector<4x256xf32>
    tpu.vector_store %arg12[%c28_196, %c0_197], %298 {strides = array<i32>} : memref<36x256xf32, #tpu.memory_space<vmem>>, vector<4x256xf32>,
    %c0_198 = arith.constant 0 : index
    %c34_199 = arith.constant 34 : index
    %300 = vector.load %arg11[%c0_198, %c34_199] : memref<4x290xf32, #tpu.memory_space<vmem>>, vector<4x256xf32>
    %cst_200 = arith.constant 0.000000e+00 : f32
    %301 = vector.shape_cast %34 : vector<1x256xi1> to vector<1x256xi1>
    %302 = vector.broadcast %301 : vector<1x256xi1> to vector<4x256xi1>
    %303 = vector.broadcast %cst_200 : f32 to vector<4x256xf32>
    %304 = arith.select %302, %300, %303 : vector<4x256xi1>, vector<4x256xf32>
    %c32_201 = arith.constant 32 : index
    %c0_202 = arith.constant 0 : index
    %305 = vector.load %arg12[%c32_201, %c0_202] : memref<36x256xf32, #tpu.memory_space<vmem>>, vector<4x256xf32>
    tpu.vector_store %arg12[%c32_201, %c0_202], %304 {strides = array<i32>} : memref<36x256xf32, #tpu.memory_space<vmem>>, vector<4x256xf32>,
    %c0_203 = arith.constant 0 : index
    %c0_204 = arith.constant 0 : index
    %306 = vector.load %arg4[%c0_203, %c0_204] : memref<4x36xf32, #tpu.memory_space<vmem>>, vector<4x36xf32>
    %c0_205 = arith.constant 0 : index
    %c0_206 = arith.constant 0 : index
    %307 = vector.load %arg12[%c0_205, %c0_206] : memref<36x256xf32, #tpu.memory_space<vmem>>, vector<36x256xf32>
    %cst_207 = arith.constant dense<0.000000e+00> : vector<4x256xf32>
    %308 = tpu.matmul %306, %307, %cst_207 {dimension_numbers = #tpu.dot_dimension_numbers<[1], [0], [0], [1], [0, 0, 1, 1], [], []>} : vector<4x36xf32>, vector<36x256xf32>, vector<4x256xf32> -> vector<4x256xf32>
    %c0_208 = arith.constant 0 : index
    %c0_209 = arith.constant 0 : index
    %309 = vector.load %arg5[%c0_208, %c0_209] : memref<4x1xf32, #tpu.memory_space<vmem>>, vector<4x1xf32>
    %310 = vector.broadcast %309 : vector<4x1xf32> to vector<4x256xf32>
    %311 = arith.addf %308, %310 : vector<4x256xf32>
    %c16_i32_210 = arith.constant 16 : i32
    %312 = tpu.dynamic_rotate %311 by %c16_i32_210 dim 1 : vector<4x256xf32>, i32 -> vector<4x256xf32>
    %313 = arith.addf %311, %312 : vector<4x256xf32>
    %c32_i32_211 = arith.constant 32 : i32
    %314 = tpu.dynamic_rotate %313 by %c32_i32_211 dim 1 : vector<4x256xf32>, i32 -> vector<4x256xf32>
    %315 = arith.addf %313, %314 : vector<4x256xf32>
    %c64_i32_212 = arith.constant 64 : i32
    %316 = tpu.dynamic_rotate %315 by %c64_i32_212 dim 1 : vector<4x256xf32>, i32 -> vector<4x256xf32>
    %317 = arith.addf %315, %316 : vector<4x256xf32>
    %c128_i32_213 = arith.constant 128 : i32
    %318 = tpu.dynamic_rotate %317 by %c128_i32_213 dim 1 : vector<4x256xf32>, i32 -> vector<4x256xf32>
    %319 = arith.addf %317, %318 : vector<4x256xf32>
    %cst_214 = arith.constant 6.250000e-02 : f32
    %320 = vector.broadcast %cst_214 : f32 to vector<4x256xf32>
    %321 = arith.mulf %319, %320 : vector<4x256xf32>
    %322 = arith.subf %311, %321 : vector<4x256xf32>
    %323 = arith.mulf %322, %322 : vector<4x256xf32>
    %c16_i32_215 = arith.constant 16 : i32
    %324 = tpu.dynamic_rotate %323 by %c16_i32_215 dim 1 : vector<4x256xf32>, i32 -> vector<4x256xf32>
    %325 = arith.addf %323, %324 : vector<4x256xf32>
    %c32_i32_216 = arith.constant 32 : i32
    %326 = tpu.dynamic_rotate %325 by %c32_i32_216 dim 1 : vector<4x256xf32>, i32 -> vector<4x256xf32>
    %327 = arith.addf %325, %326 : vector<4x256xf32>
    %c64_i32_217 = arith.constant 64 : i32
    %328 = tpu.dynamic_rotate %327 by %c64_i32_217 dim 1 : vector<4x256xf32>, i32 -> vector<4x256xf32>
    %329 = arith.addf %327, %328 : vector<4x256xf32>
    %c128_i32_218 = arith.constant 128 : i32
    %330 = tpu.dynamic_rotate %329 by %c128_i32_218 dim 1 : vector<4x256xf32>, i32 -> vector<4x256xf32>
    %331 = arith.addf %329, %330 : vector<4x256xf32>
    %cst_219 = arith.constant 6.250000e-02 : f32
    %332 = vector.broadcast %cst_219 : f32 to vector<4x256xf32>
    %333 = arith.mulf %331, %332 : vector<4x256xf32>
    %cst_220 = arith.constant 9.99999974E-6 : f32
    %334 = vector.broadcast %cst_220 : f32 to vector<4x256xf32>
    %335 = arith.addf %333, %334 : vector<4x256xf32>
    %336 = math.rsqrt %335 : vector<4x256xf32>
    %337 = arith.mulf %322, %336 : vector<4x256xf32>
    %c0_221 = arith.constant 0 : index
    %c0_222 = arith.constant 0 : index
    %338 = vector.load %arg6[%c0_221, %c0_222] : memref<1x256xf32, #tpu.memory_space<vmem>>, vector<1x256xf32>
    %339 = vector.broadcast %338 : vector<1x256xf32> to vector<4x256xf32>
    %340 = arith.mulf %337, %339 : vector<4x256xf32>
    %c0_223 = arith.constant 0 : index
    %c0_224 = arith.constant 0 : index
    %341 = vector.load %arg7[%c0_223, %c0_224] : memref<1x256xf32, #tpu.memory_space<vmem>>, vector<1x256xf32>
    %342 = vector.broadcast %341 : vector<1x256xf32> to vector<4x256xf32>
    %343 = arith.addf %340, %342 : vector<4x256xf32>
    %cst_225 = arith.constant 5.000000e-01 : f32
    %344 = vector.broadcast %cst_225 : f32 to vector<4x256xf32>
    %345 = arith.mulf %344, %343 : vector<4x256xf32>
    %cst_226 = arith.constant 0.707106769 : f32
    %346 = vector.broadcast %cst_226 : f32 to vector<4x256xf32>
    %347 = arith.mulf %343, %346 : vector<4x256xf32>
    %348 = math.erf %347 : vector<4x256xf32>
    %cst_227 = arith.constant 1.000000e+00 : f32
    %349 = vector.broadcast %cst_227 : f32 to vector<4x256xf32>
    %350 = arith.addf %349, %348 : vector<4x256xf32>
    %351 = arith.mulf %345, %350 : vector<4x256xf32>
    %c0_228 = arith.constant 0 : index
    %c17_229 = arith.constant 17 : index
    %352 = vector.load %arg11[%c0_228, %c17_229] : memref<4x290xf32, #tpu.memory_space<vmem>>, vector<4x256xf32>
    tpu.vector_store %arg11[%c0_228, %c17_229], %351 {strides = array<i32>} : memref<4x290xf32, #tpu.memory_space<vmem>>, vector<4x256xf32>,
    %c0_230 = arith.constant 0 : index
    %c0_231 = arith.constant 0 : index
    %353 = vector.load %arg11[%c0_230, %c0_231] : memref<4x290xf32, #tpu.memory_space<vmem>>, vector<4x256xf32>
    %cst_232 = arith.constant 0.000000e+00 : f32
    %354 = vector.shape_cast %25 : vector<1x256xi1> to vector<1x256xi1>
    %355 = vector.broadcast %354 : vector<1x256xi1> to vector<4x256xi1>
    %356 = vector.broadcast %cst_232 : f32 to vector<4x256xf32>
    %357 = arith.select %355, %353, %356 : vector<4x256xi1>, vector<4x256xf32>
    %c0_233 = arith.constant 0 : index
    %c0_234 = arith.constant 0 : index
    %358 = vector.load %arg12[%c0_233, %c0_234] : memref<36x256xf32, #tpu.memory_space<vmem>>, vector<4x256xf32>
    tpu.vector_store %arg12[%c0_233, %c0_234], %357 {strides = array<i32>} : memref<36x256xf32, #tpu.memory_space<vmem>>, vector<4x256xf32>,
    %c0_235 = arith.constant 0 : index
    %c1_236 = arith.constant 1 : index
    %359 = vector.load %arg11[%c0_235, %c1_236] : memref<4x290xf32, #tpu.memory_space<vmem>>, vector<4x256xf32>
    %c4_237 = arith.constant 4 : index
    %c0_238 = arith.constant 0 : index
    %360 = vector.load %arg12[%c4_237, %c0_238] : memref<36x256xf32, #tpu.memory_space<vmem>>, vector<4x256xf32>
    tpu.vector_store %arg12[%c4_237, %c0_238], %359 {strides = array<i32>} : memref<36x256xf32, #tpu.memory_space<vmem>>, vector<4x256xf32>,
    %c0_239 = arith.constant 0 : index
    %c2_240 = arith.constant 2 : index
    %361 = vector.load %arg11[%c0_239, %c2_240] : memref<4x290xf32, #tpu.memory_space<vmem>>, vector<4x256xf32>
    %cst_241 = arith.constant 0.000000e+00 : f32
    %362 = vector.shape_cast %34 : vector<1x256xi1> to vector<1x256xi1>
    %363 = vector.broadcast %362 : vector<1x256xi1> to vector<4x256xi1>
    %364 = vector.broadcast %cst_241 : f32 to vector<4x256xf32>
    %365 = arith.select %363, %361, %364 : vector<4x256xi1>, vector<4x256xf32>
    %c8_242 = arith.constant 8 : index
    %c0_243 = arith.constant 0 : index
    %366 = vector.load %arg12[%c8_242, %c0_243] : memref<36x256xf32, #tpu.memory_space<vmem>>, vector<4x256xf32>
    tpu.vector_store %arg12[%c8_242, %c0_243], %365 {strides = array<i32>} : memref<36x256xf32, #tpu.memory_space<vmem>>, vector<4x256xf32>,
    %c0_244 = arith.constant 0 : index
    %c16_245 = arith.constant 16 : index
    %367 = vector.load %arg11[%c0_244, %c16_245] : memref<4x290xf32, #tpu.memory_space<vmem>>, vector<4x256xf32>
    %cst_246 = arith.constant 0.000000e+00 : f32
    %368 = vector.shape_cast %25 : vector<1x256xi1> to vector<1x256xi1>
    %369 = vector.broadcast %368 : vector<1x256xi1> to vector<4x256xi1>
    %370 = vector.broadcast %cst_246 : f32 to vector<4x256xf32>
    %371 = arith.select %369, %367, %370 : vector<4x256xi1>, vector<4x256xf32>
    %c12_247 = arith.constant 12 : index
    %c0_248 = arith.constant 0 : index
    %372 = vector.load %arg12[%c12_247, %c0_248] : memref<36x256xf32, #tpu.memory_space<vmem>>, vector<4x256xf32>
    tpu.vector_store %arg12[%c12_247, %c0_248], %371 {strides = array<i32>} : memref<36x256xf32, #tpu.memory_space<vmem>>, vector<4x256xf32>,
    %c0_249 = arith.constant 0 : index
    %c17_250 = arith.constant 17 : index
    %373 = vector.load %arg11[%c0_249, %c17_250] : memref<4x290xf32, #tpu.memory_space<vmem>>, vector<4x256xf32>
    %c16_251 = arith.constant 16 : index
    %c0_252 = arith.constant 0 : index
    %374 = vector.load %arg12[%c16_251, %c0_252] : memref<36x256xf32, #tpu.memory_space<vmem>>, vector<4x256xf32>
    tpu.vector_store %arg12[%c16_251, %c0_252], %373 {strides = array<i32>} : memref<36x256xf32, #tpu.memory_space<vmem>>, vector<4x256xf32>,
    %c0_253 = arith.constant 0 : index
    %c18_254 = arith.constant 18 : index
    %375 = vector.load %arg11[%c0_253, %c18_254] : memref<4x290xf32, #tpu.memory_space<vmem>>, vector<4x256xf32>
    %cst_255 = arith.constant 0.000000e+00 : f32
    %376 = vector.shape_cast %34 : vector<1x256xi1> to vector<1x256xi1>
    %377 = vector.broadcast %376 : vector<1x256xi1> to vector<4x256xi1>
    %378 = vector.broadcast %cst_255 : f32 to vector<4x256xf32>
    %379 = arith.select %377, %375, %378 : vector<4x256xi1>, vector<4x256xf32>
    %c20_256 = arith.constant 20 : index
    %c0_257 = arith.constant 0 : index
    %380 = vector.load %arg12[%c20_256, %c0_257] : memref<36x256xf32, #tpu.memory_space<vmem>>, vector<4x256xf32>
    tpu.vector_store %arg12[%c20_256, %c0_257], %379 {strides = array<i32>} : memref<36x256xf32, #tpu.memory_space<vmem>>, vector<4x256xf32>,
    %c0_258 = arith.constant 0 : index
    %c32_259 = arith.constant 32 : index
    %381 = vector.load %arg11[%c0_258, %c32_259] : memref<4x290xf32, #tpu.memory_space<vmem>>, vector<4x256xf32>
    %cst_260 = arith.constant 0.000000e+00 : f32
    %382 = vector.shape_cast %25 : vector<1x256xi1> to vector<1x256xi1>
    %383 = vector.broadcast %382 : vector<1x256xi1> to vector<4x256xi1>
    %384 = vector.broadcast %cst_260 : f32 to vector<4x256xf32>
    %385 = arith.select %383, %381, %384 : vector<4x256xi1>, vector<4x256xf32>
    %c24_261 = arith.constant 24 : index
    %c0_262 = arith.constant 0 : index
    %386 = vector.load %arg12[%c24_261, %c0_262] : memref<36x256xf32, #tpu.memory_space<vmem>>, vector<4x256xf32>
    tpu.vector_store %arg12[%c24_261, %c0_262], %385 {strides = array<i32>} : memref<36x256xf32, #tpu.memory_space<vmem>>, vector<4x256xf32>,
    %c0_263 = arith.constant 0 : index
    %c33_264 = arith.constant 33 : index
    %387 = vector.load %arg11[%c0_263, %c33_264] : memref<4x290xf32, #tpu.memory_space<vmem>>, vector<4x256xf32>
    %c28_265 = arith.constant 28 : index
    %c0_266 = arith.constant 0 : index
    %388 = vector.load %arg12[%c28_265, %c0_266] : memref<36x256xf32, #tpu.memory_space<vmem>>, vector<4x256xf32>
    tpu.vector_store %arg12[%c28_265, %c0_266], %387 {strides = array<i32>} : memref<36x256xf32, #tpu.memory_space<vmem>>, vector<4x256xf32>,
    %c0_267 = arith.constant 0 : index
    %c34_268 = arith.constant 34 : index
    %389 = vector.load %arg11[%c0_267, %c34_268] : memref<4x290xf32, #tpu.memory_space<vmem>>, vector<4x256xf32>
    %cst_269 = arith.constant 0.000000e+00 : f32
    %390 = vector.shape_cast %34 : vector<1x256xi1> to vector<1x256xi1>
    %391 = vector.broadcast %390 : vector<1x256xi1> to vector<4x256xi1>
    %392 = vector.broadcast %cst_269 : f32 to vector<4x256xf32>
    %393 = arith.select %391, %389, %392 : vector<4x256xi1>, vector<4x256xf32>
    %c32_270 = arith.constant 32 : index
    %c0_271 = arith.constant 0 : index
    %394 = vector.load %arg12[%c32_270, %c0_271] : memref<36x256xf32, #tpu.memory_space<vmem>>, vector<4x256xf32>
    tpu.vector_store %arg12[%c32_270, %c0_271], %393 {strides = array<i32>} : memref<36x256xf32, #tpu.memory_space<vmem>>, vector<4x256xf32>,
    %c0_272 = arith.constant 0 : index
    %c0_273 = arith.constant 0 : index
    %395 = vector.load %arg8[%c0_272, %c0_273] : memref<4x36xf32, #tpu.memory_space<vmem>>, vector<4x36xf32>
    %c0_274 = arith.constant 0 : index
    %c0_275 = arith.constant 0 : index
    %396 = vector.load %arg12[%c0_274, %c0_275] : memref<36x256xf32, #tpu.memory_space<vmem>>, vector<36x256xf32>
    %cst_276 = arith.constant dense<0.000000e+00> : vector<4x256xf32>
    %397 = tpu.matmul %395, %396, %cst_276 {dimension_numbers = #tpu.dot_dimension_numbers<[1], [0], [0], [1], [0, 0, 1, 1], [], []>} : vector<4x36xf32>, vector<36x256xf32>, vector<4x256xf32> -> vector<4x256xf32>
    %c0_277 = arith.constant 0 : index
    %c0_278 = arith.constant 0 : index
    %398 = vector.load %arg9[%c0_277, %c0_278] : memref<4x1xf32, #tpu.memory_space<vmem>>, vector<4x1xf32>
    %399 = vector.broadcast %398 : vector<4x1xf32> to vector<4x256xf32>
    %400 = arith.addf %397, %399 : vector<4x256xf32>
    %401 = arith.addf %400, %222 : vector<4x256xf32>
    %c1_279 = arith.constant 1 : index
    %c0_280 = arith.constant 0 : index
    %c0_281 = arith.constant 0 : index
    %402 = vector.load %arg10[%c1_279, %c0_280, %c0_281] : memref<2x4x256xf32, #tpu.memory_space<vmem>>, vector<1x4x256xf32>
    %403 = vector.shape_cast %402 : vector<1x4x256xf32> to vector<4x256xf32>
    %404 = vector.shape_cast %401 : vector<4x256xf32> to vector<1x4x256xf32>
    tpu.vector_store %arg10[%c1_279, %c0_280, %c0_281], %404 {strides = array<i32>} : memref<2x4x256xf32, #tpu.memory_space<vmem>>, vector<1x4x256xf32>,
    return
  }
  func.func @transform_0(%arg0: i32) -> (i32, i32, i32) {
    %c0_i32 = arith.constant 0 : i32
    %c0_i32_0 = arith.constant 0 : i32
    %c0_i32_1 = arith.constant 0 : i32
    %c0_i32_2 = arith.constant 0 : i32
    return %c0_i32, %c0_i32_0, %c0_i32_1 : i32, i32, i32
  }
  func.func @transform_1(%arg0: i32) -> (i32, i32) {
    %c0_i32 = arith.constant 0 : i32
    %c0_i32_0 = arith.constant 0 : i32
    %c0_i32_1 = arith.constant 0 : i32
    return %c0_i32, %c0_i32_0 : i32, i32
  }
  func.func @transform_2(%arg0: i32) -> (i32, i32) {
    %c0_i32 = arith.constant 0 : i32
    %c0_i32_0 = arith.constant 0 : i32
    %c0_i32_1 = arith.constant 0 : i32
    return %c0_i32, %c0_i32_0 : i32, i32
  }
  func.func @transform_3(%arg0: i32) -> (i32, i32) {
    %c0_i32 = arith.constant 0 : i32
    %c0_i32_0 = arith.constant 0 : i32
    %c0_i32_1 = arith.constant 0 : i32
    return %c0_i32, %c0_i32_0 : i32, i32
  }
  func.func @transform_4(%arg0: i32) -> (i32, i32) {
    %c0_i32 = arith.constant 0 : i32
    %c0_i32_0 = arith.constant 0 : i32
    %c0_i32_1 = arith.constant 0 : i32
    return %c0_i32, %c0_i32_0 : i32, i32
  }
  func.func @transform_5(%arg0: i32) -> (i32, i32) {
    %c0_i32 = arith.constant 0 : i32
    %c0_i32_0 = arith.constant 0 : i32
    %c0_i32_1 = arith.constant 0 : i32
    return %c0_i32, %c0_i32_0 : i32, i32
  }
  func.func @transform_6(%arg0: i32) -> (i32, i32) {
    %c0_i32 = arith.constant 0 : i32
    %c0_i32_0 = arith.constant 0 : i32
    %c0_i32_1 = arith.constant 0 : i32
    return %c0_i32, %c0_i32_0 : i32, i32
  }
  func.func @transform_7(%arg0: i32) -> (i32, i32) {
    %c0_i32 = arith.constant 0 : i32
    %c0_i32_0 = arith.constant 0 : i32
    %c0_i32_1 = arith.constant 0 : i32
    return %c0_i32, %c0_i32_0 : i32, i32
  }
  func.func @transform_8(%arg0: i32) -> (i32, i32) {
    %c0_i32 = arith.constant 0 : i32
    %c0_i32_0 = arith.constant 0 : i32
    %c0_i32_1 = arith.constant 0 : i32
    return %c0_i32, %c0_i32_0 : i32, i32
  }
  func.func @transform_9(%arg0: i32) -> (i32, i32, i32) {
    %c0_i32 = arith.constant 0 : i32
    %c0_i32_0 = arith.constant 0 : i32
    %c0_i32_1 = arith.constant 0 : i32
    %c0_i32_2 = arith.constant 0 : i32
    return %c0_i32, %c0_i32_0, %c0_i32_1 : i32, i32, i32
  }
}

</mosaic_0001>

<llo_original>
// kernel: tpu_custom_call.1
$region0: #{tpu_custom_call.1}
  #allocation0 [shape = 'u32[]', space=smem, size = 0x4, offset = 0x4, fixed_abs, tag = 'smem constant byte address 0x4 - core index']
  #allocation1 [shape = 'u32[144,128]{1,0:T(1,128)}', space=vmem, size = 0x12000, scoped, tag = 'internal scratch']
  #allocation2 [shape = 'f32[4,290]{1,0:T(4,128)}', space=vmem, size = 0x1800, scoped, tag = 'scratch operand']
  #allocation3 [shape = 'f32[36,256]{1,0:T(8,128)}', space=vmem, size = 0xa000, scoped, tag = 'scratch operand']
  %s0 = inlined_call_operand.hbm [shape: f32[2,4,256], index: 0, kind: input, shape index: {}]
  %s1 = inlined_call_operand.vmem [shape: f32[1,256], index: 1, kind: input, shape index: {}]
  %s2 = inlined_call_operand.vmem [shape: f32[1,256], index: 2, kind: input, shape index: {}]
  %s3 = inlined_call_operand.vmem [shape: f32[4,36], index: 3, kind: input, shape index: {}]
  %s4 = inlined_call_operand.vmem [shape: f32[4,1], index: 4, kind: input, shape index: {}]
  %s5 = inlined_call_operand.vmem [shape: f32[1,256], index: 5, kind: input, shape index: {}]
  %s6 = inlined_call_operand.vmem [shape: f32[1,256], index: 6, kind: input, shape index: {}]
  %s7 = inlined_call_operand.vmem [shape: f32[4,36], index: 7, kind: input, shape index: {}]
  %s8 = inlined_call_operand.vmem [shape: f32[4,1], index: 8, kind: input, shape index: {}]
  %s9 = inlined_call_operand.hbm [shape: f32[2,4,256], index: 9, kind: output, shape index: {}]
  %s10 = sld [smem:[#allocation0]]
  $region50: #{tpu_custom_call.1} parent=0
    _
  %s12 = ssub.s32 1, %s10
  %s13 = scalar_select 0, %s12, %s10
  $region1: #{tpu_custom_call.1} parent=0
    #allocation4 [shape = 'u8[8192]{0}', space=vmem, size = 0x2000, scoped, tag = 'input window, operand 0, single buffered']
    #allocation5 [shape = 's32[1]{0}', space=sflag, size = 0x4, scoped, tag = 'scoped memory for tpu_custom_call.1']
    #allocation6 [shape = 's32[1]{0}', space=sflag, size = 0x4, scoped, tag = 'scoped memory for tpu_custom_call.1']
    #allocation7 [shape = 'u8[8192]{0}', space=vmem, size = 0x2000, scoped, tag = 'output window, operand 0, single buffered']
    %14 = vsyncpa [#allocation5], 0
    %15 = vsyncpa [#allocation6], 0
    // Predicated region
    $region2: #{tpu_custom_call.1} parent=1 // pred_check
      _
    $region3: #{tpu_custom_call.1} parent=1 // pred_check_branch
      %17 = sbr.rel (0) target = $region5
    $region4: #{tpu_custom_call.1} parent=1 // pred_region
      %s19 = ssub.s32 256, 256
      %20 = vsyncadd [#allocation5], %s19
      %s21 = sshll.u32 [#allocation4], 4
      %s22 = int_to_ptr.vmem [resolvable:$true] %s21
      %27 = dma.hbm_to_vmem [thread:$0]  %s0, 256, %s22, [#allocation5], 128, 128, 8
    $region5: #{tpu_custom_call.1} parent=1 // pred_fallthru
      _
    // Predicated region
    $region6: #{tpu_custom_call.1} parent=1 // pred_check
      _
    $region7: #{tpu_custom_call.1} parent=1 // pred_check_branch
      %29 = sbr.rel (0) target = $region9
    $region8: #{tpu_custom_call.1} parent=1 // pred_region
      _
    $region9: #{tpu_custom_call.1} parent=1 // pred_fallthru
      _
    // Predicated region
    $region10: #{tpu_custom_call.1} parent=1 // pred_check
      _
    $region11: #{tpu_custom_call.1} parent=1 // pred_check_branch
      %31 = sbr.rel (0) target = $region13
    $region12: #{tpu_custom_call.1} parent=1 // pred_region
      _
    $region13: #{tpu_custom_call.1} parent=1 // pred_fallthru
      _
    // Predicated region
    $region14: #{tpu_custom_call.1} parent=1 // pred_check
      _
    $region15: #{tpu_custom_call.1} parent=1 // pred_check_branch
      %33 = sbr.rel (0) target = $region17
    $region16: #{tpu_custom_call.1} parent=1 // pred_region
      _
    $region17: #{tpu_custom_call.1} parent=1 // pred_fallthru
      _
    // Predicated region
    $region18: #{tpu_custom_call.1} parent=1 // pred_check
      _
    $region19: #{tpu_custom_call.1} parent=1 // pred_check_branch
      %35 = sbr.rel (0) target = $region21
    $region20: #{tpu_custom_call.1} parent=1 // pred_region
      _
    $region21: #{tpu_custom_call.1} parent=1 // pred_fallthru
      _
    // Predicated region
    $region22: #{tpu_custom_call.1} parent=1 // pred_check
      _
    $region23: #{tpu_custom_call.1} parent=1 // pred_check_branch
      %37 = sbr.rel (0) target = $region25
    $region24: #{tpu_custom_call.1} parent=1 // pred_region
      _
    $region25: #{tpu_custom_call.1} parent=1 // pred_fallthru
      _
    // Predicated region
    $region26: #{tpu_custom_call.1} parent=1 // pred_check
      _
    $region27: #{tpu_custom_call.1} parent=1 // pred_check_branch
      %39 = sbr.rel (0) target = $region29
    $region28: #{tpu_custom_call.1} parent=1 // pred_region
      _
    $region29: #{tpu_custom_call.1} parent=1 // pred_fallthru
      _
    // Predicated region
    $region30: #{tpu_custom_call.1} parent=1 // pred_check
      _
    $region31: #{tpu_custom_call.1} parent=1 // pred_check_branch
      %41 = sbr.rel (0) target = $region33
    $region32: #{tpu_custom_call.1} parent=1 // pred_region
      _
    $region33: #{tpu_custom_call.1} parent=1 // pred_fallthru
      _
    // Predicated region
    $region34: #{tpu_custom_call.1} parent=1 // pred_check
      _
    $region35: #{tpu_custom_call.1} parent=1 // pred_check_branch
      %43 = sbr.rel (0) target = $region37
    $region36: #{tpu_custom_call.1} parent=1 // pred_region
      _
    $region37: #{tpu_custom_call.1} parent=1 // pred_fallthru
      _
    // Predicated region
    $region38: #{tpu_custom_call.1} parent=1 // pred_check
      _
    $region39: #{tpu_custom_call.1} parent=1 // pred_check_branch
      %45 = sbr.rel (0) target = $region41
    $region40: #{tpu_custom_call.1} parent=1 // pred_region
      %46 = dma.done [#allocation5], 256
    $region41: #{tpu_custom_call.1} parent=1 // pred_fallthru
      _
    %v47 = vlaneseq
    %v48 = vand.u32 %v47, 127
    %v49 = vadd.s32 %v48, 128
    %vm50 = vcmp.lt.s32.totalorder %v48, 0
    %v51 = vsub.s32 0, %v48
    %v52 = vsel %vm50, %v51, %v48
    %v53 = vshrl.u32 %v52, 4
    %v54 = vand.u32 %v52, 15
    %v55 = vsub.s32 0, %v54
    %v56 = vsel %vm50, %v55, %v54
    %vm57 = vcmp.lt.s32.totalorder %v49, 0
    %v58 = vsub.s32 0, %v49
    %v59 = vsel %vm57, %v58, %v49
    %v60 = vshrl.u32 %v59, 4
    %v61 = vand.u32 %v59, 15
    %v62 = vsub.s32 0, %v61
    %v63 = vsel %vm57, %v62, %v61
    %vm64 = vcmp.ne.s32.totalorder %v56, 0
    %vm65 = vcmp.ne.s32.totalorder %v63, 0
    %vm66 = vcmp.lt.s32.totalorder %v56, 0
    %vm67 = vcmp.lt.s32.totalorder %v63, 0
    %vm68 = vmand %vm66, %vm64
    %vm69 = vmand %vm67, %vm65
    %v70 = vadd.s32 %v56, 16
    %v71 = vadd.s32 %v63, 16
    %v72 = vsel %vm68, %v70, %v56
    %v73 = vsel %vm69, %v71, %v63
    %v74 = vadd.s32 %v72, 4294967295
    %v75 = vadd.s32 %v73, 4294967295
    %vm76 = vcmp.ge.s32.totalorder %v74, 0
    %vm77 = vcmp.ge.s32.totalorder %v75, 0
    %vm78 = vcmp.lt.s32.totalorder %v74, 16
    %vm79 = vcmp.lt.s32.totalorder %v75, 16
    %vm80 = vmand %vm76, %vm78
    %vm81 = vmand %vm77, %vm79
    %v82 = vadd.s32 %v72, 1
    %v83 = vadd.s32 %v73, 1
    %vm84 = vcmp.ge.s32.totalorder %v82, 0
    %vm85 = vcmp.ge.s32.totalorder %v83, 0
    %vm86 = vcmp.lt.s32.totalorder %v82, 16
    %vm87 = vcmp.lt.s32.totalorder %v83, 16
    %vm88 = vmand %vm84, %vm86
    %vm89 = vmand %vm85, %vm87
    %90 = vst [vmem:[#allocation2] sm:$0xff] 0.0
    %vm91 = vcmask 273408
    %92 = vst.msk [vmem:[#allocation2 + $0x8] sm:$0xf] %vm91, 0.0
    %v93 = vld [vmem:[#allocation4] sm:$0xff]
    %v95 = vcombine.high %v93, %v93
    %97 = vrot.lane.b32.xlu0 %v93, 16
    %v98 = vpop.permute.xlu0 %97
    %99 = vrot.lane.b32.xlu0 %v95, 16
    %v100 = vpop.permute.xlu0 %99
    %vm101 = vcmp.lt.s32.totalorder %v48, 16
    %v102 = vsel %vm101, %v98, %v100
    %v103 = vsel %vm101, %v100, %v98
    %v106 = vcombine.low %v103, %v102
    %v108 = vadd.f32 %v93, %v106
    %v110 = vcombine.high %v108, %v108
    %112 = vrot.lane.b32.xlu0 %v108, 32
    %v113 = vpop.permute.xlu0 %112
    %114 = vrot.lane.b32.xlu0 %v110, 32
    %v115 = vpop.permute.xlu0 %114
    %vm116 = vcmp.lt.s32.totalorder %v48, 32
    %v117 = vsel %vm116, %v113, %v115
    %v118 = vsel %vm116, %v115, %v113
    %v121 = vcombine.low %v118, %v117
    %v123 = vadd.f32 %v108, %v121
    %v125 = vcombine.high %v123, %v123
    %127 = vrot.lane.b32.xlu0 %v123, 64
    %v128 = vpop.permute.xlu0 %127
    %129 = vrot.lane.b32.xlu0 %v125, 64
    %v130 = vpop.permute.xlu0 %129
    %vm131 = vcmp.lt.s32.totalorder %v48, 64
    %v132 = vsel %vm131, %v128, %v130
    %v133 = vsel %vm131, %v130, %v128
    %v136 = vcombine.low %v133, %v132
    %v138 = vadd.f32 %v123, %v136
    %v140 = vcombine.high %v138, %v138
    %v141 = vcombine.low %v140, %v138
    %v143 = vadd.f32 %v138, %v141
    %v144 = vmul.f32 %v143, 0.0625
    %v145 = vsub.f32 %v93, %v144
    %v146 = vmul.f32 %v145, %v145
    %v148 = vcombine.high %v146, %v146
    %150 = vrot.lane.b32.xlu0 %v146, 16
    %v151 = vpop.permute.xlu0 %150
    %152 = vrot.lane.b32.xlu0 %v148, 16
    %v153 = vpop.permute.xlu0 %152
    %v154 = vsel %vm101, %v151, %v153
    %v155 = vsel %vm101, %v153, %v151
    %v158 = vcombine.low %v155, %v154
    %v160 = vadd.f32 %v146, %v158
    %v162 = vcombine.high %v160, %v160
    %164 = vrot.lane.b32.xlu0 %v160, 32
    %v165 = vpop.permute.xlu0 %164
    %166 = vrot.lane.b32.xlu0 %v162, 32
    %v167 = vpop.permute.xlu0 %166
    %v168 = vsel %vm116, %v165, %v167
    %v169 = vsel %vm116, %v167, %v165
    %v172 = vcombine.low %v169, %v168
    %v174 = vadd.f32 %v160, %v172
    %v176 = vcombine.high %v174, %v174
    %178 = vrot.lane.b32.xlu0 %v174, 64
    %v179 = vpop.permute.xlu0 %178
    %180 = vrot.lane.b32.xlu0 %v176, 64
    %v181 = vpop.permute.xlu0 %180
    %v182 = vsel %vm131, %v179, %v181
    %v183 = vsel %vm131, %v181, %v179
    %v186 = vcombine.low %v183, %v182
    %v188 = vadd.f32 %v174, %v186
    %v190 = vcombine.high %v188, %v188
    %v191 = vcombine.low %v190, %v188
    %v193 = vadd.f32 %v188, %v191
    %v194 = vmul.f32 %v193, 0.0625
    %v195 = vadd.f32 %v194, 1e-05
    %v196 = vrsqrt.pop %v195
    %v197 = vmul.f32 %v145, %v196
    %v198 = vld [vmem:[%s1] sm:$0x3]
    %v200 = vlaneseq
    %v201 = vshrl.u32 %v200, 7
    %v202 = vsub.s32 0, %v201
    %v203 = vrot.slane %v198, %v202
    %v204 = vlaneseq
    %v205 = vshrl.u32 %v204, 7
    %v206 = vsub.s32 1, %v205
    %v207 = vrot.slane %v198, %v206
    %v208 = vcombine.low %v203, %v207
    %v210 = vmul.f32 %v197, %v208
    %v211 = vld [vmem:[%s2] sm:$0x3]
    %v213 = vlaneseq
    %v214 = vshrl.u32 %v213, 7
    %v215 = vsub.s32 0, %v214
    %v216 = vrot.slane %v211, %v215
    %v217 = vlaneseq
    %v218 = vshrl.u32 %v217, 7
    %v219 = vsub.s32 1, %v218
    %v220 = vrot.slane %v211, %v219
    %v221 = vcombine.low %v216, %v220
    %v223 = vadd.f32 %v210, %v221
    %v224 = vmul.f32 %v223, 0.5
    %v225 = vmul.f32 %v223, 0.70710677
    %v226 = verf.f32.pop %v225
    %v227 = vadd.f32 %v226, 1.0
    %v228 = vmul.f32 %v224, %v227
    %230 = vrot.lane.b32.xlu0 %v228, 17
    %v231 = vpop.permute.xlu0 %230
    %v232 = vrot.slane %v231, 4
    %vm233 = vcmask 138240
    %v234 = vsel %vm233, %v232, %v231
    %vm237 = vcmask 1043592
    %vm238 = vcmask 1047556
    %vm239 = vmor %vm238, %vm237
    %240 = vst.msk [vmem:[#allocation2] sm:$0xff] %vm239, %v234
    %vm241 = vcmask 134144
    %242 = vst.msk [vmem:[#allocation2 + $0x8] sm:$0xf] %vm241, %v232
    %v243 = vld [vmem:[#allocation2] sm:$0xff]
    %v244 = vsel %vm80, 1, 0
    %v245 = vsel %vm81, 1, 0
    %vm246 = vcmp.eq.s32.totalorder %v244, 1
    %vm247 = vcmp.eq.s32.totalorder %v245, 1
    %v249 = vcombine.high %v243, %v243
    %v251 = vsel %vm246, %v243, 0.0
    %v252 = vsel %vm247, %v249, 0.0
    %253 = vst [vmem:[#allocation3] sm:$0xf] %v251
    %254 = vst [vmem:[#allocation3 + $0x8] sm:$0xf] %v252
    %v255 = vld [vmem:[#allocation2] sm:$0xff]
    %v256 = vld [vmem:[#allocation2 + $0x8] sm:$0xf]
    %v259 = vcombine.low %v255, %v255
    %v260 = vcombine.low %v256, %v256
    %261 = vrot.lane.b32.xlu0 %v259, 127
    %v262 = vpop.permute.xlu0 %261
    %263 = vrot.lane.b32.xlu0 %v255, 127
    %v264 = vpop.permute.xlu0 %263
    %265 = vrot.lane.b32.xlu0 %v260, 127
    %v266 = vpop.permute.xlu0 %265
    %vm267 = vcmask 1039360
    %v268 = vsel %vm267, %v262, %v264
    %v269 = vsel %vm267, %v264, %v266
    %272 = vst [vmem:[#allocation3] sm:$0xf0] %v268
    %273 = vst [vmem:[#allocation3 + $0x8] sm:$0xf0] %v269
    %v274 = vld [vmem:[#allocation2] sm:$0xff]
    %v275 = vld [vmem:[#allocation2 + $0x8] sm:$0xf]
    %v276 = vsel %vm88, 1, 0
    %v277 = vsel %vm89, 1, 0
    %vm278 = vcmp.eq.s32.totalorder %v276, 1
    %vm279 = vcmp.eq.s32.totalorder %v277, 1
    %v282 = vcombine.high %v274, %v274
    %283 = vrot.lane.b32.xlu0 %v274, 126
    %v284 = vpop.permute.xlu0 %283
    %285 = vrot.lane.b32.xlu0 %v282, 126
    %v286 = vpop.permute.xlu0 %285
    %287 = vrot.lane.b32.xlu0 %v275, 126
    %v288 = vpop.permute.xlu0 %287
    %vm289 = vcmask 1031168
    %v290 = vsel %vm289, %v284, %v286
    %v291 = vsel %vm289, %v286, %v288
    %v294 = vsel %vm278, %v290, 0.0
    %v295 = vsel %vm279, %v291, 0.0
    %296 = vst [vmem:[#allocation3 + $0x10] sm:$0xf] %v294
    %297 = vst [vmem:[#allocation3 + $0x18] sm:$0xf] %v295
    %v298 = vld [vmem:[#allocation2] sm:$0xff]
    %v299 = vld [vmem:[#allocation2 + $0x8] sm:$0xf]
    %v302 = vcombine.high %v298, %v298
    %303 = vrot.lane.b32.xlu0 %v298, 112
    %v304 = vpop.permute.xlu0 %303
    %305 = vrot.lane.b32.xlu0 %v302, 112
    %v306 = vpop.permute.xlu0 %305
    %307 = vrot.lane.b32.xlu0 %v299, 112
    %v308 = vpop.permute.xlu0 %307
    %vm309 = vcmask 916480
    %v310 = vsel %vm309, %v304, %v306
    %v311 = vsel %vm309, %v306, %v308
    %v314 = vsel %vm246, %v310, 0.0
    %v315 = vsel %vm247, %v311, 0.0
    %v318 = vrot.slane %v314, 4
    %v319 = vrot.slane %v315, 4
    %322 = vst [vmem:[#allocation3 + $0x10] sm:$0xf0] %v318
    %323 = vst [vmem:[#allocation3 + $0x18] sm:$0xf0] %v319
    %v324 = vld [vmem:[#allocation2] sm:$0xff]
    %v325 = vld [vmem:[#allocation2 + $0x8] sm:$0xf]
    %v328 = vcombine.high %v324, %v324
    %329 = vrot.lane.b32.xlu0 %v324, 111
    %v330 = vpop.permute.xlu0 %329
    %331 = vrot.lane.b32.xlu0 %v328, 111
    %v332 = vpop.permute.xlu0 %331
    %333 = vrot.lane.b32.xlu0 %v325, 111
    %v334 = vpop.permute.xlu0 %333
    %vm335 = vcmask 908288
    %v336 = vsel %vm335, %v330, %v332
    %v337 = vsel %vm335, %v332, %v334
    %340 = vst [vmem:[#allocation3 + $0x20] sm:$0xf] %v336
    %341 = vst [vmem:[#allocation3 + $0x28] sm:$0xf] %v337
    %v342 = vld [vmem:[#allocation2] sm:$0xff]
    %v343 = vld [vmem:[#allocation2 + $0x8] sm:$0xf]
    %v346 = vcombine.high %v342, %v342
    %347 = vrot.lane.b32.xlu0 %v342, 110
    %v348 = vpop.permute.xlu0 %347
    %349 = vrot.lane.b32.xlu0 %v346, 110
    %v350 = vpop.permute.xlu0 %349
    %351 = vrot.lane.b32.xlu0 %v343, 110
    %v352 = vpop.permute.xlu0 %351
    %vm353 = vcmask 900096
    %v354 = vsel %vm353, %v348, %v350
    %v355 = vsel %vm353, %v350, %v352
    %v358 = vsel %vm278, %v354, 0.0
    %v359 = vsel %vm279, %v355, 0.0
    %v362 = vrot.slane %v358, 4
    %v363 = vrot.slane %v359, 4
    %366 = vst [vmem:[#allocation3 + $0x20] sm:$0xf0] %v362
    %367 = vst [vmem:[#allocation3 + $0x28] sm:$0xf0] %v363
    %v368 = vld [vmem:[#allocation2] sm:$0xff]
    %v369 = vld [vmem:[#allocation2 + $0x8] sm:$0xf]
    %v372 = vcombine.high %v368, %v368
    %373 = vrot.lane.b32.xlu0 %v368, 96
    %v374 = vpop.permute.xlu0 %373
    %375 = vrot.lane.b32.xlu0 %v372, 96
    %v376 = vpop.permute.xlu0 %375
    %377 = vrot.lane.b32.xlu0 %v369, 96
    %v378 = vpop.permute.xlu0 %377
    %vm379 = vcmask 785408
    %v380 = vsel %vm379, %v374, %v376
    %v381 = vsel %vm379, %v376, %v378
    %v384 = vsel %vm246, %v380, 0.0
    %v385 = vsel %vm247, %v381, 0.0
    %386 = vst [vmem:[#allocation3 + $0x30] sm:$0xf] %v384
    %387 = vst [vmem:[#allocation3 + $0x38] sm:$0xf] %v385
    %v388 = vld [vmem:[#allocation2] sm:$0xff]
    %v389 = vld [vmem:[#allocation2 + $0x8] sm:$0xf]
    %v392 = vcombine.low %v388, %v388
    %v393 = vcombine.low %v389, %v389
    %394 = vrot.lane.b32.xlu0 %v392, 95
    %v395 = vpop.permute.xlu0 %394
    %396 = vrot.lane.b32.xlu0 %v388, 95
    %v397 = vpop.permute.xlu0 %396
    %398 = vrot.lane.b32.xlu0 %v393, 95
    %v399 = vpop.permute.xlu0 %398
    %vm400 = vcmask 777216
    %v401 = vsel %vm400, %v395, %v397
    %v402 = vsel %vm400, %v397, %v399
    %405 = vst [vmem:[#allocation3 + $0x30] sm:$0xf0] %v401
    %406 = vst [vmem:[#allocation3 + $0x38] sm:$0xf0] %v402
    %v407 = vld [vmem:[#allocation2] sm:$0xff]
    %v408 = vld [vmem:[#allocation2 + $0x8] sm:$0xf]
    %v411 = vcombine.high %v407, %v407
    %412 = vrot.lane.b32.xlu0 %v407, 94
    %v413 = vpop.permute.xlu0 %412
    %414 = vrot.lane.b32.xlu0 %v411, 94
    %v415 = vpop.permute.xlu0 %414
    %416 = vrot.lane.b32.xlu0 %v408, 94
    %v417 = vpop.permute.xlu0 %416
    %vm418 = vcmask 769024
    %v419 = vsel %vm418, %v413, %v415
    %v420 = vsel %vm418, %v415, %v417
    %v423 = vsel %vm278, %v419, 0.0
    %v424 = vsel %vm279, %v420, 0.0
    %425 = vst [vmem:[#allocation3 + $0x40] sm:$0xf] %v423
    %426 = vst [vmem:[#allocation3 + $0x48] sm:$0xf] %v424
    %v427 = vld [vmem:[%s3] sm:$0xf]
    %v428 = vld [vmem:[#allocation3] sm:$0xff]
    %v429 = vld [vmem:[#allocation3 + $0x8] sm:$0xff]
    %v430 = vld [vmem:[#allocation3 + $0x10] sm:$0xff]
    %v431 = vld [vmem:[#allocation3 + $0x18] sm:$0xff]
    %v432 = vld [vmem:[#allocation3 + $0x20] sm:$0xff]
    %v433 = vld [vmem:[#allocation3 + $0x28] sm:$0xff]
    %v434 = vld [vmem:[#allocation3 + $0x30] sm:$0xff]
    %v435 = vld [vmem:[#allocation3 + $0x38] sm:$0xff]
    %v436 = vld [vmem:[#allocation3 + $0x40] sm:$0xf]
    %v437 = vld [vmem:[#allocation3 + $0x48] sm:$0xf]
    %v438 = vld [vmem:[%s4] sm:$0xf]
    %440 = vset.pattern.permute.xlu0 0
    %441 = vperm.xlu0 %440, %v438
    %v442 = vpop.permute.xlu0 %441
    %vm444 = vcmask 293888
    %v446 = vsel %vm444, %v427, 0
    %vm448 = vcmask 1043456
    %v450 = vsel %vm448, %v436, 0
    %v453 = vsel %vm448, %v437, 0
    %455 = vmatprep.subr.mxu0 %v429
    %456 = vmatpush1.msra.mxu0 %v428
    %457 = vmatprep.subr.mxu0 %v431
    %458 = vmatpush1.msra.mxu0 %v430
    %459 = vmatprep.subr.mxu0 %v433
    %460 = vmatpush1.msra.mxu0 %v432
    %461 = vmatprep.subr.mxu0 %v435
    %462 = vmatpush1.msra.mxu0 %v434
    %463 = vmatprep.subr.mxu0 %v453
    %464 = vmatpush1.msra.mxu0 %v450
    %465 = vmatprep.subr.mxu0 0.0
    %466 = vmatpush1.msra.mxu0 0.0
    %467 = vmatprep.subr.mxu0 0.0
    %468 = vmatpush1.msra.mxu0 0.0
    %469 = vmatprep.subr.mxu0 0.0
    %470 = vmatpush1.msra.mxu0 0.0
    %471 = vmatprep.subr.mxu0 0.0
    %472 = vmatpush1.msra.mxu0 0.0
    %473 = vmatprep.subr.mxu0 0.0
    %474 = vmatpush1.msra.mxu0 0.0
    %475 = vmatprep.subr.mxu0 0.0
    %476 = vmatpush1.msra.mxu0 0.0
    %477 = vmatprep.subr.mxu0 0.0
    %478 = vmatpush1.msra.mxu0 0.0
    %479 = vmatprep.subr.mxu0 0.0
    %480 = vmatpush1.msra.mxu0 0.0
    %481 = vmatprep.subr.mxu0 0.0
    %482 = vmatpush1.msra.mxu0 0.0
    %483 = vmatprep.subr.mxu0 0.0
    %484 = vmatpush1.msra.mxu0 0.0
    %485 = vmatprep.subr.mxu0 0.0
    %486 = vmatpush1.msra.mxu0 0.0
    %487 = vmatprep.subr.mxu0 0.0
    %488 = vmatpush1.msra.mxu0 0.0
    %489 = vmatprep.subr.mxu0 0.0
    %490 = vmatpush1.msra.mxu0 0.0
    %491 = vmatprep.subr.mxu0 0.0
    %492 = vmatpush1.msra.mxu0 0.0
    %493 = vmatprep.subr.mxu0 0.0
    %494 = vmatpush1.msra.mxu0 0.0
    %495 = vmatprep.subr.mxu0 0.0
    %496 = vmatpush1.msra.mxu0 0.0
    %497 = vmatprep.subr.mxu0 0.0
    %498 = vmatpush1.msra.mxu0 0.0
    %499 = vmatprep.subr.mxu0 0.0
    %500 = vmatpush1.msra.mxu0 0.0
    %501 = vmatprep.subr.mxu0 0.0
    %502 = vmatpush1.msra.mxu0 0.0
    %503 = vmatprep.subr.mxu0 0.0
    %504 = vmatpush1.msra.mxu0 0.0
    %505 = vmatprep.subr.mxu0 0.0
    %506 = vmatpush1.msra.mxu0 0.0
    %507 = vmatprep.subr.mxu0 0.0
    %508 = vmatpush1.msra.mxu0 0.0
    %509 = vmatprep.subr.mxu0 0.0
    %510 = vmatpush1.msra.mxu0 0.0
    %511 = vmatprep.subr.mxu0 0.0
    %512 = vmatpush1.msra.mxu0 0.0
    %513 = vmatprep.subr.mxu0 0.0
    %514 = vmatpush1.msra.mxu0 0.0
    %515 = vmatprep.subr.mxu0 0.0
    %516 = vmatpush1.msra.mxu0 0.0
    %517 = vmatprep.subr.mxu0 0.0
    %518 = vmatpush1.msra.mxu0 0.0
    %519 = vmatprep.mubr.f32.mxu0 0.0
    %520 = vmatmul.mubr.f32.gmra.mrb[0].mxu0 %v446
    %v521 = vpop.f32.mrb[0].mxu0
    %v522 = vadd.f32 %v442, %v521
    %v523 = vpop.f32.mrb[0].mxu0
    %v524 = vadd.f32 %v442, %v523
    %525 = vdwg.mxu0
    %526 = vrot.lane.b32.xlu0 %v522, 16
    %v527 = vpop.permute.xlu0 %526
    %528 = vrot.lane.b32.xlu0 %v524, 16
    %v529 = vpop.permute.xlu0 %528
    %v530 = vsel %vm101, %v527, %v529
    %v531 = vsel %vm101, %v529, %v527
    %v532 = vadd.f32 %v522, %v531
    %v533 = vadd.f32 %v524, %v530
    %534 = vrot.lane.b32.xlu0 %v532, 32
    %v535 = vpop.permute.xlu0 %534
    %536 = vrot.lane.b32.xlu0 %v533, 32
    %v537 = vpop.permute.xlu0 %536
    %v538 = vsel %vm116, %v535, %v537
    %v539 = vsel %vm116, %v537, %v535
    %v540 = vadd.f32 %v532, %v539
    %v541 = vadd.f32 %v533, %v538
    %542 = vrot.lane.b32.xlu0 %v540, 64
    %v543 = vpop.permute.xlu0 %542
    %544 = vrot.lane.b32.xlu0 %v541, 64
    %v545 = vpop.permute.xlu0 %544
    %v546 = vsel %vm131, %v543, %v545
    %v547 = vsel %vm131, %v545, %v543
    %v548 = vadd.f32 %v540, %v547
    %v549 = vadd.f32 %v541, %v546
    %v550 = vadd.f32 %v548, %v549
    %v551 = vmul.f32 %v550, 0.0625
    %v552 = vsub.f32 %v522, %v551
    %v553 = vsub.f32 %v524, %v551
    %v554 = vmul.f32 %v552, %v552
    %v555 = vmul.f32 %v553, %v553
    %556 = vrot.lane.b32.xlu0 %v554, 16
    %v557 = vpop.permute.xlu0 %556
    %558 = vrot.lane.b32.xlu0 %v555, 16
    %v559 = vpop.permute.xlu0 %558
    %v560 = vsel %vm101, %v557, %v559
    %v561 = vsel %vm101, %v559, %v557
    %v562 = vadd.f32 %v554, %v561
    %v563 = vadd.f32 %v555, %v560
    %564 = vrot.lane.b32.xlu0 %v562, 32
    %v565 = vpop.permute.xlu0 %564
    %566 = vrot.lane.b32.xlu0 %v563, 32
    %v567 = vpop.permute.xlu0 %566
    %v568 = vsel %vm116, %v565, %v567
    %v569 = vsel %vm116, %v567, %v565
    %v570 = vadd.f32 %v562, %v569
    %v571 = vadd.f32 %v563, %v568
    %572 = vrot.lane.b32.xlu0 %v570, 64
    %v573 = vpop.permute.xlu0 %572
    %574 = vrot.lane.b32.xlu0 %v571, 64
    %v575 = vpop.permute.xlu0 %574
    %v576 = vsel %vm131, %v573, %v575
    %v577 = vsel %vm131, %v575, %v573
    %v578 = vadd.f32 %v570, %v577
    %v579 = vadd.f32 %v571, %v576
    %v580 = vadd.f32 %v578, %v579
    %v581 = vmul.f32 %v580, 0.0625
    %v582 = vadd.f32 %v581, 1e-05
    %v583 = vrsqrt.pop %v582
    %v584 = vmul.f32 %v552, %v583
    %v585 = vmul.f32 %v553, %v583
    %v586 = vld [vmem:[%s5] sm:$0x3]
    %v588 = vlaneseq
    %v589 = vshrl.u32 %v588, 7
    %v590 = vsub.s32 0, %v589
    %v591 = vrot.slane %v586, %v590
    %v592 = vlaneseq
    %v593 = vshrl.u32 %v592, 7
    %v594 = vsub.s32 1, %v593
    %v595 = vrot.slane %v586, %v594
    %v598 = vmul.f32 %v584, %v591
    %v599 = vmul.f32 %v585, %v595
    %v600 = vld [vmem:[%s6] sm:$0x3]
    %v602 = vlaneseq
    %v603 = vshrl.u32 %v602, 7
    %v604 = vsub.s32 0, %v603
    %v605 = vrot.slane %v600, %v604
    %v606 = vlaneseq
    %v607 = vshrl.u32 %v606, 7
    %v608 = vsub.s32 1, %v607
    %v609 = vrot.slane %v600, %v608
    %v612 = vadd.f32 %v598, %v605
    %v613 = vadd.f32 %v599, %v609
    %v614 = vmul.f32 %v612, 0.5
    %v615 = vmul.f32 %v613, 0.5
    %v616 = vmul.f32 %v612, 0.70710677
    %v617 = vmul.f32 %v613, 0.70710677
    %v618 = verf.f32.pop %v616
    %v619 = verf.f32.pop %v617
    %v620 = vadd.f32 %v618, 1.0
    %v621 = vadd.f32 %v619, 1.0
    %v622 = vmul.f32 %v614, %v620
    %v623 = vmul.f32 %v615, %v621
    %v626 = vcombine.low %v622, %v623
    %627 = vrot.lane.b32.xlu0 %v626, 17
    %v628 = vpop.permute.xlu0 %627
    %v629 = vrot.slane %v628, 4
    %v630 = vsel %vm233, %v629, %v628
    %633 = vst.msk [vmem:[#allocation2] sm:$0xff] %vm239, %v630
    %634 = vst.msk [vmem:[#allocation2 + $0x8] sm:$0xf] %vm241, %v629
    %v635 = vld [vmem:[#allocation2] sm:$0xff]
    %v637 = vcombine.high %v635, %v635
    %v639 = vsel %vm246, %v635, 0.0
    %v640 = vsel %vm247, %v637, 0.0
    %641 = vst [vmem:[#allocation3] sm:$0xf] %v639
    %642 = vst [vmem:[#allocation3 + $0x8] sm:$0xf] %v640
    %v643 = vld [vmem:[#allocation2] sm:$0xff]
    %v644 = vld [vmem:[#allocation2 + $0x8] sm:$0xf]
    %v647 = vcombine.low %v643, %v643
    %v648 = vcombine.low %v644, %v644
    %649 = vrot.lane.b32.xlu0 %v647, 127
    %v650 = vpop.permute.xlu0 %649
    %651 = vrot.lane.b32.xlu0 %v643, 127
    %v652 = vpop.permute.xlu0 %651
    %653 = vrot.lane.b32.xlu0 %v648, 127
    %v654 = vpop.permute.xlu0 %653
    %v655 = vsel %vm267, %v650, %v652
    %v656 = vsel %vm267, %v652, %v654
    %659 = vst [vmem:[#allocation3] sm:$0xf0] %v655
    %660 = vst [vmem:[#allocation3 + $0x8] sm:$0xf0] %v656
    %v661 = vld [vmem:[#allocation2] sm:$0xff]
    %v662 = vld [vmem:[#allocation2 + $0x8] sm:$0xf]
    %v665 = vcombine.high %v661, %v661
    %666 = vrot.lane.b32.xlu0 %v661, 126
    %v667 = vpop.permute.xlu0 %666
    %668 = vrot.lane.b32.xlu0 %v665, 126
    %v669 = vpop.permute.xlu0 %668
    %670 = vrot.lane.b32.xlu0 %v662, 126
    %v671 = vpop.permute.xlu0 %670
    %v672 = vsel %vm289, %v667, %v669
    %v673 = vsel %vm289, %v669, %v671
    %v676 = vsel %vm278, %v672, 0.0
    %v677 = vsel %vm279, %v673, 0.0
    %678 = vst [vmem:[#allocation3 + $0x10] sm:$0xf] %v676
    %679 = vst [vmem:[#allocation3 + $0x18] sm:$0xf] %v677
    %v680 = vld [vmem:[#allocation2] sm:$0xff]
    %v681 = vld [vmem:[#allocation2 + $0x8] sm:$0xf]
    %v684 = vcombine.high %v680, %v680
    %685 = vrot.lane.b32.xlu0 %v680, 112
    %v686 = vpop.permute.xlu0 %685
    %687 = vrot.lane.b32.xlu0 %v684, 112
    %v688 = vpop.permute.xlu0 %687
    %689 = vrot.lane.b32.xlu0 %v681, 112
    %v690 = vpop.permute.xlu0 %689
    %v691 = vsel %vm309, %v686, %v688
    %v692 = vsel %vm309, %v688, %v690
    %v695 = vsel %vm246, %v691, 0.0
    %v696 = vsel %vm247, %v692, 0.0
    %v699 = vrot.slane %v695, 4
    %v700 = vrot.slane %v696, 4
    %703 = vst [vmem:[#allocation3 + $0x10] sm:$0xf0] %v699
    %704 = vst [vmem:[#allocation3 + $0x18] sm:$0xf0] %v700
    %v705 = vld [vmem:[#allocation2] sm:$0xff]
    %v706 = vld [vmem:[#allocation2 + $0x8] sm:$0xf]
    %v709 = vcombine.high %v705, %v705
    %710 = vrot.lane.b32.xlu0 %v705, 111
    %v711 = vpop.permute.xlu0 %710
    %712 = vrot.lane.b32.xlu0 %v709, 111
    %v713 = vpop.permute.xlu0 %712
    %714 = vrot.lane.b32.xlu0 %v706, 111
    %v715 = vpop.permute.xlu0 %714
    %v716 = vsel %vm335, %v711, %v713
    %v717 = vsel %vm335, %v713, %v715
    %720 = vst [vmem:[#allocation3 + $0x20] sm:$0xf] %v716
    %721 = vst [vmem:[#allocation3 + $0x28] sm:$0xf] %v717
    %v722 = vld [vmem:[#allocation2] sm:$0xff]
    %v723 = vld [vmem:[#allocation2 + $0x8] sm:$0xf]
    %v726 = vcombine.high %v722, %v722
    %727 = vrot.lane.b32.xlu0 %v722, 110
    %v728 = vpop.permute.xlu0 %727
    %729 = vrot.lane.b32.xlu0 %v726, 110
    %v730 = vpop.permute.xlu0 %729
    %731 = vrot.lane.b32.xlu0 %v723, 110
    %v732 = vpop.permute.xlu0 %731
    %v733 = vsel %vm353, %v728, %v730
    %v734 = vsel %vm353, %v730, %v732
    %v737 = vsel %vm278, %v733, 0.0
    %v738 = vsel %vm279, %v734, 0.0
    %v741 = vrot.slane %v737, 4
    %v742 = vrot.slane %v738, 4
    %745 = vst [vmem:[#allocation3 + $0x20] sm:$0xf0] %v741
    %746 = vst [vmem:[#allocation3 + $0x28] sm:$0xf0] %v742
    %v747 = vld [vmem:[#allocation2] sm:$0xff]
    %v748 = vld [vmem:[#allocation2 + $0x8] sm:$0xf]
    %v751 = vcombine.high %v747, %v747
    %752 = vrot.lane.b32.xlu0 %v747, 96
    %v753 = vpop.permute.xlu0 %752
    %754 = vrot.lane.b32.xlu0 %v751, 96
    %v755 = vpop.permute.xlu0 %754
    %756 = vrot.lane.b32.xlu0 %v748, 96
    %v757 = vpop.permute.xlu0 %756
    %v758 = vsel %vm379, %v753, %v755
    %v759 = vsel %vm379, %v755, %v757
    %v762 = vsel %vm246, %v758, 0.0
    %v763 = vsel %vm247, %v759, 0.0
    %764 = vst [vmem:[#allocation3 + $0x30] sm:$0xf] %v762
    %765 = vst [vmem:[#allocation3 + $0x38] sm:$0xf] %v763
    %v766 = vld [vmem:[#allocation2] sm:$0xff]
    %v767 = vld [vmem:[#allocation2 + $0x8] sm:$0xf]
    %v770 = vcombine.low %v766, %v766
    %v771 = vcombine.low %v767, %v767
    %772 = vrot.lane.b32.xlu0 %v770, 95
    %v773 = vpop.permute.xlu0 %772
    %774 = vrot.lane.b32.xlu0 %v766, 95
    %v775 = vpop.permute.xlu0 %774
    %776 = vrot.lane.b32.xlu0 %v771, 95
    %v777 = vpop.permute.xlu0 %776
    %v778 = vsel %vm400, %v773, %v775
    %v779 = vsel %vm400, %v775, %v777
    %782 = vst [vmem:[#allocation3 + $0x30] sm:$0xf0] %v778
    %783 = vst [vmem:[#allocation3 + $0x38] sm:$0xf0] %v779
    %v784 = vld [vmem:[#allocation2] sm:$0xff]
    %v785 = vld [vmem:[#allocation2 + $0x8] sm:$0xf]
    %v788 = vcombine.high %v784, %v784
    %789 = vrot.lane.b32.xlu0 %v784, 94
    %v790 = vpop.permute.xlu0 %789
    %791 = vrot.lane.b32.xlu0 %v788, 94
    %v792 = vpop.permute.xlu0 %791
    %793 = vrot.lane.b32.xlu0 %v785, 94
    %v794 = vpop.permute.xlu0 %793
    %v795 = vsel %vm418, %v790, %v792
    %v796 = vsel %vm418, %v792, %v794
    %v799 = vsel %vm278, %v795, 0.0
    %v800 = vsel %vm279, %v796, 0.0
    %801 = vst [vmem:[#allocation3 + $0x40] sm:$0xf] %v799
    %802 = vst [vmem:[#allocation3 + $0x48] sm:$0xf] %v800
    %v803 = vld [vmem:[%s7] sm:$0xf]
    %v804 = vld [vmem:[#allocation3] sm:$0xff]
    %v805 = vld [vmem:[#allocation3 + $0x8] sm:$0xff]
    %v806 = vld [vmem:[#allocation3 + $0x10] sm:$0xff]
    %v807 = vld [vmem:[#allocation3 + $0x18] sm:$0xff]
    %v808 = vld [vmem:[#allocation3 + $0x20] sm:$0xff]
    %v809 = vld [vmem:[#allocation3 + $0x28] sm:$0xff]
    %v810 = vld [vmem:[#allocation3 + $0x30] sm:$0xff]
    %v811 = vld [vmem:[#allocation3 + $0x38] sm:$0xff]
    %v812 = vld [vmem:[#allocation3 + $0x40] sm:$0xf]
    %v813 = vld [vmem:[#allocation3 + $0x48] sm:$0xf]
    %v814 = vld [vmem:[%s8] sm:$0xf]
    %816 = vset.pattern.permute.xlu0 0
    %817 = vperm.xlu0 %816, %v814
    %v818 = vpop.permute.xlu0 %817
    %v821 = vsel %vm444, %v803, 0
    %v824 = vsel %vm448, %v812, 0
    %v827 = vsel %vm448, %v813, 0
    %829 = vmatprep.subr.mxu0 %v805
    %830 = vmatpush1.msra.mxu0 %v804
    %831 = vmatprep.subr.mxu0 %v807
    %832 = vmatpush1.msra.mxu0 %v806
    %833 = vmatprep.subr.mxu0 %v809
    %834 = vmatpush1.msra.mxu0 %v808
    %835 = vmatprep.subr.mxu0 %v811
    %836 = vmatpush1.msra.mxu0 %v810
    %837 = vmatprep.subr.mxu0 %v827
    %838 = vmatpush1.msra.mxu0 %v824
    %839 = vmatprep.subr.mxu0 0.0
    %840 = vmatpush1.msra.mxu0 0.0
    %841 = vmatprep.subr.mxu0 0.0
    %842 = vmatpush1.msra.mxu0 0.0
    %843 = vmatprep.subr.mxu0 0.0
    %844 = vmatpush1.msra.mxu0 0.0
    %845 = vmatprep.subr.mxu0 0.0
    %846 = vmatpush1.msra.mxu0 0.0
    %847 = vmatprep.subr.mxu0 0.0
    %848 = vmatpush1.msra.mxu0 0.0
    %849 = vmatprep.subr.mxu0 0.0
    %850 = vmatpush1.msra.mxu0 0.0
    %851 = vmatprep.subr.mxu0 0.0
    %852 = vmatpush1.msra.mxu0 0.0
    %853 = vmatprep.subr.mxu0 0.0
    %854 = vmatpush1.msra.mxu0 0.0
    %855 = vmatprep.subr.mxu0 0.0
    %856 = vmatpush1.msra.mxu0 0.0
    %857 = vmatprep.subr.mxu0 0.0
    %858 = vmatpush1.msra.mxu0 0.0
    %859 = vmatprep.subr.mxu0 0.0
    %860 = vmatpush1.msra.mxu0 0.0
    %861 = vmatprep.subr.mxu0 0.0
    %862 = vmatpush1.msra.mxu0 0.0
    %863 = vmatprep.subr.mxu0 0.0
    %864 = vmatpush1.msra.mxu0 0.0
    %865 = vmatprep.subr.mxu0 0.0
    %866 = vmatpush1.msra.mxu0 0.0
    %867 = vmatprep.subr.mxu0 0.0
    %868 = vmatpush1.msra.mxu0 0.0
    %869 = vmatprep.subr.mxu0 0.0
    %870 = vmatpush1.msra.mxu0 0.0
    %871 = vmatprep.subr.mxu0 0.0
    %872 = vmatpush1.msra.mxu0 0.0
    %873 = vmatprep.subr.mxu0 0.0
    %874 = vmatpush1.msra.mxu0 0.0
    %875 = vmatprep.subr.mxu0 0.0
    %876 = vmatpush1.msra.mxu0 0.0
    %877 = vmatprep.subr.mxu0 0.0
    %878 = vmatpush1.msra.mxu0 0.0
    %879 = vmatprep.subr.mxu0 0.0
    %880 = vmatpush1.msra.mxu0 0.0
    %881 = vmatprep.subr.mxu0 0.0
    %882 = vmatpush1.msra.mxu0 0.0
    %883 = vmatprep.subr.mxu0 0.0
    %884 = vmatpush1.msra.mxu0 0.0
    %885 = vmatprep.subr.mxu0 0.0
    %886 = vmatpush1.msra.mxu0 0.0
    %887 = vmatprep.subr.mxu0 0.0
    %888 = vmatpush1.msra.mxu0 0.0
    %889 = vmatprep.subr.mxu0 0.0
    %890 = vmatpush1.msra.mxu0 0.0
    %891 = vmatprep.subr.mxu0 0.0
    %892 = vmatpush1.msra.mxu0 0.0
    %893 = vmatprep.mubr.f32.mxu0 0.0
    %894 = vmatmul.mubr.f32.gmra.mrb[0].mxu0 %v821
    %v895 = vpop.f32.mrb[0].mxu0
    %v896 = vadd.f32 %v818, %v895
    %v897 = vpop.f32.mrb[0].mxu0
    %v898 = vadd.f32 %v818, %v897
    %899 = vdwg.mxu0
    %v900 = vadd.f32 %v896, %v93
    %v901 = vadd.f32 %v898, %v95
    %v904 = vcombine.low %v900, %v901
    %906 = vst [vmem:[#allocation7] sm:$0xff] %v904
    %s907 = scalar_lea.vmem [#allocation4], 8
    %v908 = vld [vmem:[%s907] sm:$0xff]
    %v910 = vcombine.high %v908, %v908
    %912 = vrot.lane.b32.xlu0 %v908, 16
    %v913 = vpop.permute.xlu0 %912
    %914 = vrot.lane.b32.xlu0 %v910, 16
    %v915 = vpop.permute.xlu0 %914
    %v916 = vsel %vm101, %v913, %v915
    %v917 = vsel %vm101, %v915, %v913
    %v920 = vcombine.low %v917, %v916
    %v922 = vadd.f32 %v908, %v920
    %v924 = vcombine.high %v922, %v922
    %926 = vrot.lane.b32.xlu0 %v922, 32
    %v927 = vpop.permute.xlu0 %926
    %928 = vrot.lane.b32.xlu0 %v924, 32
    %v929 = vpop.permute.xlu0 %928
    %v930 = vsel %vm116, %v927, %v929
    %v931 = vsel %vm116, %v929, %v927
    %v934 = vcombine.low %v931, %v930
    %v936 = vadd.f32 %v922, %v934
    %v938 = vcombine.high %v936, %v936
    %940 = vrot.lane.b32.xlu0 %v936, 64
    %v941 = vpop.permute.xlu0 %940
    %942 = vrot.lane.b32.xlu0 %v938, 64
    %v943 = vpop.permute.xlu0 %942
    %v944 = vsel %vm131, %v941, %v943
    %v945 = vsel %vm131, %v943, %v941
    %v948 = vcombine.low %v945, %v944
    %v950 = vadd.f32 %v936, %v948
    %v952 = vcombine.high %v950, %v950
    %v953 = vcombine.low %v952, %v950
    %v955 = vadd.f32 %v950, %v953
    %v956 = vmul.f32 %v955, 0.0625
    %v957 = vsub.f32 %v908, %v956
    %v958 = vmul.f32 %v957, %v957
    %v960 = vcombine.high %v958, %v958
    %962 = vrot.lane.b32.xlu0 %v958, 16
    %v963 = vpop.permute.xlu0 %962
    %964 = vrot.lane.b32.xlu0 %v960, 16
    %v965 = vpop.permute.xlu0 %964
    %v966 = vsel %vm101, %v963, %v965
    %v967 = vsel %vm101, %v965, %v963
    %v970 = vcombine.low %v967, %v966
    %v972 = vadd.f32 %v958, %v970
    %v974 = vcombine.high %v972, %v972
    %976 = vrot.lane.b32.xlu0 %v972, 32
    %v977 = vpop.permute.xlu0 %976
    %978 = vrot.lane.b32.xlu0 %v974, 32
    %v979 = vpop.permute.xlu0 %978
    %v980 = vsel %vm116, %v977, %v979
    %v981 = vsel %vm116, %v979, %v977
    %v984 = vcombine.low %v981, %v980
    %v986 = vadd.f32 %v972, %v984
    %v988 = vcombine.high %v986, %v986
    %990 = vrot.lane.b32.xlu0 %v986, 64
    %v991 = vpop.permute.xlu0 %990
    %992 = vrot.lane.b32.xlu0 %v988, 64
    %v993 = vpop.permute.xlu0 %992
    %v994 = vsel %vm131, %v991, %v993
    %v995 = vsel %vm131, %v993, %v991
    %v998 = vcombine.low %v995, %v994
    %v1000 = vadd.f32 %v986, %v998
    %v1002 = vcombine.high %v1000, %v1000
    %v1003 = vcombine.low %v1002, %v1000
    %v1005 = vadd.f32 %v1000, %v1003
    %v1006 = vmul.f32 %v1005, 0.0625
    %v1007 = vadd.f32 %v1006, 1e-05
    %v1008 = vrsqrt.pop %v1007
    %v1009 = vmul.f32 %v957, %v1008
    %v1010 = vld [vmem:[%s1] sm:$0x3]
    %v1012 = vlaneseq
    %v1013 = vshrl.u32 %v1012, 7
    %v1014 = vsub.s32 0, %v1013
    %v1015 = vrot.slane %v1010, %v1014
    %v1016 = vlaneseq
    %v1017 = vshrl.u32 %v1016, 7
    %v1018 = vsub.s32 1, %v1017
    %v1019 = vrot.slane %v1010, %v1018
    %v1020 = vcombine.low %v1015, %v1019
    %v1022 = vmul.f32 %v1009, %v1020
    %v1023 = vld [vmem:[%s2] sm:$0x3]
    %v1025 = vlaneseq
    %v1026 = vshrl.u32 %v1025, 7
    %v1027 = vsub.s32 0, %v1026
    %v1028 = vrot.slane %v1023, %v1027
    %v1029 = vlaneseq
    %v1030 = vshrl.u32 %v1029, 7
    %v1031 = vsub.s32 1, %v1030
    %v1032 = vrot.slane %v1023, %v1031
    %v1033 = vcombine.low %v1028, %v1032
    %v1035 = vadd.f32 %v1022, %v1033
    %v1036 = vmul.f32 %v1035, 0.5
    %v1037 = vmul.f32 %v1035, 0.70710677
    %v1038 = verf.f32.pop %v1037
    %v1039 = vadd.f32 %v1038, 1.0
    %v1040 = vmul.f32 %v1036, %v1039
    %1042 = vrot.lane.b32.xlu0 %v1040, 17
    %v1043 = vpop.permute.xlu0 %1042
    %v1044 = vrot.slane %v1043, 4
    %v1045 = vsel %vm233, %v1044, %v1043
    %1048 = vst.msk [vmem:[#allocation2] sm:$0xff] %vm239, %v1045
    %1049 = vst.msk [vmem:[#allocation2 + $0x8] sm:$0xf] %vm241, %v1044
    %v1050 = vld [vmem:[#allocation2] sm:$0xff]
    %v1052 = vcombine.high %v1050, %v1050
    %v1054 = vsel %vm246, %v1050, 0.0
    %v1055 = vsel %vm247, %v1052, 0.0
    %1056 = vst [vmem:[#allocation3] sm:$0xf] %v1054
    %1057 = vst [vmem:[#allocation3 + $0x8] sm:$0xf] %v1055
    %v1058 = vld [vmem:[#allocation2] sm:$0xff]
    %v1059 = vld [vmem:[#allocation2 + $0x8] sm:$0xf]
    %v1062 = vcombine.low %v1058, %v1058
    %v1063 = vcombine.low %v1059, %v1059
    %1064 = vrot.lane.b32.xlu0 %v1062, 127
    %v1065 = vpop.permute.xlu0 %1064
    %1066 = vrot.lane.b32.xlu0 %v1058, 127
    %v1067 = vpop.permute.xlu0 %1066
    %1068 = vrot.lane.b32.xlu0 %v1063, 127
    %v1069 = vpop.permute.xlu0 %1068
    %v1070 = vsel %vm267, %v1065, %v1067
    %v1071 = vsel %vm267, %v1067, %v1069
    %1074 = vst [vmem:[#allocation3] sm:$0xf0] %v1070
    %1075 = vst [vmem:[#allocation3 + $0x8] sm:$0xf0] %v1071
    %v1076 = vld [vmem:[#allocation2] sm:$0xff]
    %v1077 = vld [vmem:[#allocation2 + $0x8] sm:$0xf]
    %v1080 = vcombine.high %v1076, %v1076
    %1081 = vrot.lane.b32.xlu0 %v1076, 126
    %v1082 = vpop.permute.xlu0 %1081
    %1083 = vrot.lane.b32.xlu0 %v1080, 126
    %v1084 = vpop.permute.xlu0 %1083
    %1085 = vrot.lane.b32.xlu0 %v1077, 126
    %v1086 = vpop.permute.xlu0 %1085
    %v1087 = vsel %vm289, %v1082, %v1084
    %v1088 = vsel %vm289, %v1084, %v1086
    %v1091 = vsel %vm278, %v1087, 0.0
    %v1092 = vsel %vm279, %v1088, 0.0
    %1093 = vst [vmem:[#allocation3 + $0x10] sm:$0xf] %v1091
    %1094 = vst [vmem:[#allocation3 + $0x18] sm:$0xf] %v1092
    %v1095 = vld [vmem:[#allocation2] sm:$0xff]
    %v1096 = vld [vmem:[#allocation2 + $0x8] sm:$0xf]
    %v1099 = vcombine.high %v1095, %v1095
    %1100 = vrot.lane.b32.xlu0 %v1095, 112
    %v1101 = vpop.permute.xlu0 %1100
    %1102 = vrot.lane.b32.xlu0 %v1099, 112
    %v1103 = vpop.permute.xlu0 %1102
    %1104 = vrot.lane.b32.xlu0 %v1096, 112
    %v1105 = vpop.permute.xlu0 %1104
    %v1106 = vsel %vm309, %v1101, %v1103
    %v1107 = vsel %vm309, %v1103, %v1105
    %v1110 = vsel %vm246, %v1106, 0.0
    %v1111 = vsel %vm247, %v1107, 0.0
    %v1114 = vrot.slane %v1110, 4
    %v1115 = vrot.slane %v1111, 4
    %1118 = vst [vmem:[#allocation3 + $0x10] sm:$0xf0] %v1114
    %1119 = vst [vmem:[#allocation3 + $0x18] sm:$0xf0] %v1115
    %v1120 = vld [vmem:[#allocation2] sm:$0xff]
    %v1121 = vld [vmem:[#allocation2 + $0x8] sm:$0xf]
    %v1124 = vcombine.high %v1120, %v1120
    %1125 = vrot.lane.b32.xlu0 %v1120, 111
    %v1126 = vpop.permute.xlu0 %1125
    %1127 = vrot.lane.b32.xlu0 %v1124, 111
    %v1128 = vpop.permute.xlu0 %1127
    %1129 = vrot.lane.b32.xlu0 %v1121, 111
    %v1130 = vpop.permute.xlu0 %1129
    %v1131 = vsel %vm335, %v1126, %v1128
    %v1132 = vsel %vm335, %v1128, %v1130
    %1135 = vst [vmem:[#allocation3 + $0x20] sm:$0xf] %v1131
    %1136 = vst [vmem:[#allocation3 + $0x28] sm:$0xf] %v1132
    %v1137 = vld [vmem:[#allocation2] sm:$0xff]
    %v1138 = vld [vmem:[#allocation2 + $0x8] sm:$0xf]
    %v1141 = vcombine.high %v1137, %v1137
    %1142 = vrot.lane.b32.xlu0 %v1137, 110
    %v1143 = vpop.permute.xlu0 %1142
    %1144 = vrot.lane.b32.xlu0 %v1141, 110
    %v1145 = vpop.permute.xlu0 %1144
    %1146 = vrot.lane.b32.xlu0 %v1138, 110
    %v1147 = vpop.permute.xlu0 %1146
    %v1148 = vsel %vm353, %v1143, %v1145
    %v1149 = vsel %vm353, %v1145, %v1147
    %v1152 = vsel %vm278, %v1148, 0.0
    %v1153 = vsel %vm279, %v1149, 0.0
    %v1156 = vrot.slane %v1152, 4
    %v1157 = vrot.slane %v1153, 4
    %1160 = vst [vmem:[#allocation3 + $0x20] sm:$0xf0] %v1156
    %1161 = vst [vmem:[#allocation3 + $0x28] sm:$0xf0] %v1157
    %v1162 = vld [vmem:[#allocation2] sm:$0xff]
    %v1163 = vld [vmem:[#allocation2 + $0x8] sm:$0xf]
    %v1166 = vcombine.high %v1162, %v1162
    %1167 = vrot.lane.b32.xlu0 %v1162, 96
    %v1168 = vpop.permute.xlu0 %1167
    %1169 = vrot.lane.b32.xlu0 %v1166, 96
    %v1170 = vpop.permute.xlu0 %1169
    %1171 = vrot.lane.b32.xlu0 %v1163, 96
    %v1172 = vpop.permute.xlu0 %1171
    %v1173 = vsel %vm379, %v1168, %v1170
    %v1174 = vsel %vm379, %v1170, %v1172
    %v1177 = vsel %vm246, %v1173, 0.0
    %v1178 = vsel %vm247, %v1174, 0.0
    %1179 = vst [vmem:[#allocation3 + $0x30] sm:$0xf] %v1177
    %1180 = vst [vmem:[#allocation3 + $0x38] sm:$0xf] %v1178
    %v1181 = vld [vmem:[#allocation2] sm:$0xff]
    %v1182 = vld [vmem:[#allocation2 + $0x8] sm:$0xf]
    %v1185 = vcombine.low %v1181, %v1181
    %v1186 = vcombine.low %v1182, %v1182
    %1187 = vrot.lane.b32.xlu0 %v1185, 95
    %v1188 = vpop.permute.xlu0 %1187
    %1189 = vrot.lane.b32.xlu0 %v1181, 95
    %v1190 = vpop.permute.xlu0 %1189
    %1191 = vrot.lane.b32.xlu0 %v1186, 95
    %v1192 = vpop.permute.xlu0 %1191
    %v1193 = vsel %vm400, %v1188, %v1190
    %v1194 = vsel %vm400, %v1190, %v1192
    %1197 = vst [vmem:[#allocation3 + $0x30] sm:$0xf0] %v1193
    %1198 = vst [vmem:[#allocation3 + $0x38] sm:$0xf0] %v1194
    %v1199 = vld [vmem:[#allocation2] sm:$0xff]
    %v1200 = vld [vmem:[#allocation2 + $0x8] sm:$0xf]
    %v1203 = vcombine.high %v1199, %v1199
    %1204 = vrot.lane.b32.xlu0 %v1199, 94
    %v1205 = vpop.permute.xlu0 %1204
    %1206 = vrot.lane.b32.xlu0 %v1203, 94
    %v1207 = vpop.permute.xlu0 %1206
    %1208 = vrot.lane.b32.xlu0 %v1200, 94
    %v1209 = vpop.permute.xlu0 %1208
    %v1210 = vsel %vm418, %v1205, %v1207
    %v1211 = vsel %vm418, %v1207, %v1209
    %v1214 = vsel %vm278, %v1210, 0.0
    %v1215 = vsel %vm279, %v1211, 0.0
    %1216 = vst [vmem:[#allocation3 + $0x40] sm:$0xf] %v1214
    %1217 = vst [vmem:[#allocation3 + $0x48] sm:$0xf] %v1215
    %v1218 = vld [vmem:[%s3] sm:$0xf]
    %v1219 = vld [vmem:[#allocation3] sm:$0xff]
    %v1220 = vld [vmem:[#allocation3 + $0x8] sm:$0xff]
    %v1221 = vld [vmem:[#allocation3 + $0x10] sm:$0xff]
    %v1222 = vld [vmem:[#allocation3 + $0x18] sm:$0xff]
    %v1223 = vld [vmem:[#allocation3 + $0x20] sm:$0xff]
    %v1224 = vld [vmem:[#allocation3 + $0x28] sm:$0xff]
    %v1225 = vld [vmem:[#allocation3 + $0x30] sm:$0xff]
    %v1226 = vld [vmem:[#allocation3 + $0x38] sm:$0xff]
    %v1227 = vld [vmem:[#allocation3 + $0x40] sm:$0xf]
    %v1228 = vld [vmem:[#allocation3 + $0x48] sm:$0xf]
    %v1229 = vld [vmem:[%s4] sm:$0xf]
    %1231 = vset.pattern.permute.xlu0 0
    %1232 = vperm.xlu0 %1231, %v1229
    %v1233 = vpop.permute.xlu0 %1232
    %v1236 = vsel %vm444, %v1218, 0
    %v1239 = vsel %vm448, %v1227, 0
    %v1242 = vsel %vm448, %v1228, 0
    %1244 = vmatprep.subr.mxu0 %v1220
    %1245 = vmatpush1.msra.mxu0 %v1219
    %1246 = vmatprep.subr.mxu0 %v1222
    %1247 = vmatpush1.msra.mxu0 %v1221
    %1248 = vmatprep.subr.mxu0 %v1224
    %1249 = vmatpush1.msra.mxu0 %v1223
    %1250 = vmatprep.subr.mxu0 %v1226
    %1251 = vmatpush1.msra.mxu0 %v1225
    %1252 = vmatprep.subr.mxu0 %v1242
    %1253 = vmatpush1.msra.mxu0 %v1239
    %1254 = vmatprep.subr.mxu0 0.0
    %1255 = vmatpush1.msra.mxu0 0.0
    %1256 = vmatprep.subr.mxu0 0.0
    %1257 = vmatpush1.msra.mxu0 0.0
    %1258 = vmatprep.subr.mxu0 0.0
    %1259 = vmatpush1.msra.mxu0 0.0
    %1260 = vmatprep.subr.mxu0 0.0
    %1261 = vmatpush1.msra.mxu0 0.0
    %1262 = vmatprep.subr.mxu0 0.0
    %1263 = vmatpush1.msra.mxu0 0.0
    %1264 = vmatprep.subr.mxu0 0.0
    %1265 = vmatpush1.msra.mxu0 0.0
    %1266 = vmatprep.subr.mxu0 0.0
    %1267 = vmatpush1.msra.mxu0 0.0
    %1268 = vmatprep.subr.mxu0 0.0
    %1269 = vmatpush1.msra.mxu0 0.0
    %1270 = vmatprep.subr.mxu0 0.0
    %1271 = vmatpush1.msra.mxu0 0.0
    %1272 = vmatprep.subr.mxu0 0.0
    %1273 = vmatpush1.msra.mxu0 0.0
    %1274 = vmatprep.subr.mxu0 0.0
    %1275 = vmatpush1.msra.mxu0 0.0
    %1276 = vmatprep.subr.mxu0 0.0
    %1277 = vmatpush1.msra.mxu0 0.0
    %1278 = vmatprep.subr.mxu0 0.0
    %1279 = vmatpush1.msra.mxu0 0.0
    %1280 = vmatprep.subr.mxu0 0.0
    %1281 = vmatpush1.msra.mxu0 0.0
    %1282 = vmatprep.subr.mxu0 0.0
    %1283 = vmatpush1.msra.mxu0 0.0
    %1284 = vmatprep.subr.mxu0 0.0
    %1285 = vmatpush1.msra.mxu0 0.0
    %1286 = vmatprep.subr.mxu0 0.0
    %1287 = vmatpush1.msra.mxu0 0.0
    %1288 = vmatprep.subr.mxu0 0.0
    %1289 = vmatpush1.msra.mxu0 0.0
    %1290 = vmatprep.subr.mxu0 0.0
    %1291 = vmatpush1.msra.mxu0 0.0
    %1292 = vmatprep.subr.mxu0 0.0
    %1293 = vmatpush1.msra.mxu0 0.0
    %1294 = vmatprep.subr.mxu0 0.0
    %1295 = vmatpush1.msra.mxu0 0.0
    %1296 = vmatprep.subr.mxu0 0.0
    %1297 = vmatpush1.msra.mxu0 0.0
    %1298 = vmatprep.subr.mxu0 0.0
    %1299 = vmatpush1.msra.mxu0 0.0
    %1300 = vmatprep.subr.mxu0 0.0
    %1301 = vmatpush1.msra.mxu0 0.0
    %1302 = vmatprep.subr.mxu0 0.0
    %1303 = vmatpush1.msra.mxu0 0.0
    %1304 = vmatprep.subr.mxu0 0.0
    %1305 = vmatpush1.msra.mxu0 0.0
    %1306 = vmatprep.subr.mxu0 0.0
    %1307 = vmatpush1.msra.mxu0 0.0
    %1308 = vmatprep.mubr.f32.mxu0 0.0
    %1309 = vmatmul.mubr.f32.gmra.mrb[0].mxu0 %v1236
    %v1310 = vpop.f32.mrb[0].mxu0
    %v1311 = vadd.f32 %v1233, %v1310
    %v1312 = vpop.f32.mrb[0].mxu0
    %v1313 = vadd.f32 %v1233, %v1312
    %1314 = vdwg.mxu0
    %1315 = vrot.lane.b32.xlu0 %v1311, 16
    %v1316 = vpop.permute.xlu0 %1315
    %1317 = vrot.lane.b32.xlu0 %v1313, 16
    %v1318 = vpop.permute.xlu0 %1317
    %v1319 = vsel %vm101, %v1316, %v1318
    %v1320 = vsel %vm101, %v1318, %v1316
    %v1321 = vadd.f32 %v1311, %v1320
    %v1322 = vadd.f32 %v1313, %v1319
    %1323 = vrot.lane.b32.xlu0 %v1321, 32
    %v1324 = vpop.permute.xlu0 %1323
    %1325 = vrot.lane.b32.xlu0 %v1322, 32
    %v1326 = vpop.permute.xlu0 %1325
    %v1327 = vsel %vm116, %v1324, %v1326
    %v1328 = vsel %vm116, %v1326, %v1324
    %v1329 = vadd.f32 %v1321, %v1328
    %v1330 = vadd.f32 %v1322, %v1327
    %1331 = vrot.lane.b32.xlu0 %v1329, 64
    %v1332 = vpop.permute.xlu0 %1331
    %1333 = vrot.lane.b32.xlu0 %v1330, 64
    %v1334 = vpop.permute.xlu0 %1333
    %v1335 = vsel %vm131, %v1332, %v1334
    %v1336 = vsel %vm131, %v1334, %v1332
    %v1337 = vadd.f32 %v1329, %v1336
    %v1338 = vadd.f32 %v1330, %v1335
    %v1339 = vadd.f32 %v1337, %v1338
    %v1340 = vmul.f32 %v1339, 0.0625
    %v1341 = vsub.f32 %v1311, %v1340
    %v1342 = vsub.f32 %v1313, %v1340
    %v1343 = vmul.f32 %v1341, %v1341
    %v1344 = vmul.f32 %v1342, %v1342
    %1345 = vrot.lane.b32.xlu0 %v1343, 16
    %v1346 = vpop.permute.xlu0 %1345
    %1347 = vrot.lane.b32.xlu0 %v1344, 16
    %v1348 = vpop.permute.xlu0 %1347
    %v1349 = vsel %vm101, %v1346, %v1348
    %v1350 = vsel %vm101, %v1348, %v1346
    %v1351 = vadd.f32 %v1343, %v1350
    %v1352 = vadd.f32 %v1344, %v1349
    %1353 = vrot.lane.b32.xlu0 %v1351, 32
    %v1354 = vpop.permute.xlu0 %1353
    %1355 = vrot.lane.b32.xlu0 %v1352, 32
    %v1356 = vpop.permute.xlu0 %1355
    %v1357 = vsel %vm116, %v1354, %v1356
    %v1358 = vsel %vm116, %v1356, %v1354
    %v1359 = vadd.f32 %v1351, %v1358
    %v1360 = vadd.f32 %v1352, %v1357
    %1361 = vrot.lane.b32.xlu0 %v1359, 64
    %v1362 = vpop.permute.xlu0 %1361
    %1363 = vrot.lane.b32.xlu0 %v1360, 64
    %v1364 = vpop.permute.xlu0 %1363
    %v1365 = vsel %vm131, %v1362, %v1364
    %v1366 = vsel %vm131, %v1364, %v1362
    %v1367 = vadd.f32 %v1359, %v1366
    %v1368 = vadd.f32 %v1360, %v1365
    %v1369 = vadd.f32 %v1367, %v1368
    %v1370 = vmul.f32 %v1369, 0.0625
    %v1371 = vadd.f32 %v1370, 1e-05
    %v1372 = vrsqrt.pop %v1371
    %v1373 = vmul.f32 %v1341, %v1372
    %v1374 = vmul.f32 %v1342, %v1372
    %v1375 = vld [vmem:[%s5] sm:$0x3]
    %v1377 = vlaneseq
    %v1378 = vshrl.u32 %v1377, 7
    %v1379 = vsub.s32 0, %v1378
    %v1380 = vrot.slane %v1375, %v1379
    %v1381 = vlaneseq
    %v1382 = vshrl.u32 %v1381, 7
    %v1383 = vsub.s32 1, %v1382
    %v1384 = vrot.slane %v1375, %v1383
    %v1387 = vmul.f32 %v1373, %v1380
    %v1388 = vmul.f32 %v1374, %v1384
    %v1389 = vld [vmem:[%s6] sm:$0x3]
    %v1391 = vlaneseq
    %v1392 = vshrl.u32 %v1391, 7
    %v1393 = vsub.s32 0, %v1392
    %v1394 = vrot.slane %v1389, %v1393
    %v1395 = vlaneseq
    %v1396 = vshrl.u32 %v1395, 7
    %v1397 = vsub.s32 1, %v1396
    %v1398 = vrot.slane %v1389, %v1397
    %v1401 = vadd.f32 %v1387, %v1394
    %v1402 = vadd.f32 %v1388, %v1398
    %v1403 = vmul.f32 %v1401, 0.5
    %v1404 = vmul.f32 %v1402, 0.5
    %v1405 = vmul.f32 %v1401, 0.70710677
    %v1406 = vmul.f32 %v1402, 0.70710677
    %v1407 = verf.f32.pop %v1405
    %v1408 = verf.f32.pop %v1406
    %v1409 = vadd.f32 %v1407, 1.0
    %v1410 = vadd.f32 %v1408, 1.0
    %v1411 = vmul.f32 %v1403, %v1409
    %v1412 = vmul.f32 %v1404, %v1410
    %v1415 = vcombine.low %v1411, %v1412
    %1416 = vrot.lane.b32.xlu0 %v1415, 17
    %v1417 = vpop.permute.xlu0 %1416
    %v1418 = vrot.slane %v1417, 4
    %v1419 = vsel %vm233, %v1418, %v1417
    %1422 = vst.msk [vmem:[#allocation2] sm:$0xff] %vm239, %v1419
    %1423 = vst.msk [vmem:[#allocation2 + $0x8] sm:$0xf] %vm241, %v1418
    %v1424 = vld [vmem:[#allocation2] sm:$0xff]
    %v1426 = vcombine.high %v1424, %v1424
    %v1428 = vsel %vm246, %v1424, 0.0
    %v1429 = vsel %vm247, %v1426, 0.0
    %1430 = vst [vmem:[#allocation3] sm:$0xf] %v1428
    %1431 = vst [vmem:[#allocation3 + $0x8] sm:$0xf] %v1429
    %v1432 = vld [vmem:[#allocation2] sm:$0xff]
    %v1433 = vld [vmem:[#allocation2 + $0x8] sm:$0xf]
    %v1436 = vcombine.low %v1432, %v1432
    %v1437 = vcombine.low %v1433, %v1433
    %1438 = vrot.lane.b32.xlu0 %v1436, 127
    %v1439 = vpop.permute.xlu0 %1438
    %1440 = vrot.lane.b32.xlu0 %v1432, 127
    %v1441 = vpop.permute.xlu0 %1440
    %1442 = vrot.lane.b32.xlu0 %v1437, 127
    %v1443 = vpop.permute.xlu0 %1442
    %v1444 = vsel %vm267, %v1439, %v1441
    %v1445 = vsel %vm267, %v1441, %v1443
    %1448 = vst [vmem:[#allocation3] sm:$0xf0] %v1444
    %1449 = vst [vmem:[#allocation3 + $0x8] sm:$0xf0] %v1445
    %v1450 = vld [vmem:[#allocation2] sm:$0xff]
    %v1451 = vld [vmem:[#allocation2 + $0x8] sm:$0xf]
    %v1454 = vcombine.high %v1450, %v1450
    %1455 = vrot.lane.b32.xlu0 %v1450, 126
    %v1456 = vpop.permute.xlu0 %1455
    %1457 = vrot.lane.b32.xlu0 %v1454, 126
    %v1458 = vpop.permute.xlu0 %1457
    %1459 = vrot.lane.b32.xlu0 %v1451, 126
    %v1460 = vpop.permute.xlu0 %1459
    %v1461 = vsel %vm289, %v1456, %v1458
    %v1462 = vsel %vm289, %v1458, %v1460
    %v1465 = vsel %vm278, %v1461, 0.0
    %v1466 = vsel %vm279, %v1462, 0.0
    %1467 = vst [vmem:[#allocation3 + $0x10] sm:$0xf] %v1465
    %1468 = vst [vmem:[#allocation3 + $0x18] sm:$0xf] %v1466
    %v1469 = vld [vmem:[#allocation2] sm:$0xff]
    %v1470 = vld [vmem:[#allocation2 + $0x8] sm:$0xf]
    %v1473 = vcombine.high %v1469, %v1469
    %1474 = vrot.lane.b32.xlu0 %v1469, 112
    %v1475 = vpop.permute.xlu0 %1474
    %1476 = vrot.lane.b32.xlu0 %v1473, 112
    %v1477 = vpop.permute.xlu0 %1476
    %1478 = vrot.lane.b32.xlu0 %v1470, 112
    %v1479 = vpop.permute.xlu0 %1478
    %v1480 = vsel %vm309, %v1475, %v1477
    %v1481 = vsel %vm309, %v1477, %v1479
    %v1484 = vsel %vm246, %v1480, 0.0
    %v1485 = vsel %vm247, %v1481, 0.0
    %v1488 = vrot.slane %v1484, 4
    %v1489 = vrot.slane %v1485, 4
    %1492 = vst [vmem:[#allocation3 + $0x10] sm:$0xf0] %v1488
    %1493 = vst [vmem:[#allocation3 + $0x18] sm:$0xf0] %v1489
    %v1494 = vld [vmem:[#allocation2] sm:$0xff]
    %v1495 = vld [vmem:[#allocation2 + $0x8] sm:$0xf]
    %v1498 = vcombine.high %v1494, %v1494
    %1499 = vrot.lane.b32.xlu0 %v1494, 111
    %v1500 = vpop.permute.xlu0 %1499
    %1501 = vrot.lane.b32.xlu0 %v1498, 111
    %v1502 = vpop.permute.xlu0 %1501
    %1503 = vrot.lane.b32.xlu0 %v1495, 111
    %v1504 = vpop.permute.xlu0 %1503
    %v1505 = vsel %vm335, %v1500, %v1502
    %v1506 = vsel %vm335, %v1502, %v1504
    %1509 = vst [vmem:[#allocation3 + $0x20] sm:$0xf] %v1505
    %1510 = vst [vmem:[#allocation3 + $0x28] sm:$0xf] %v1506
    %v1511 = vld [vmem:[#allocation2] sm:$0xff]
    %v1512 = vld [vmem:[#allocation2 + $0x8] sm:$0xf]
    %v1515 = vcombine.high %v1511, %v1511
    %1516 = vrot.lane.b32.xlu0 %v1511, 110
    %v1517 = vpop.permute.xlu0 %1516
    %1518 = vrot.lane.b32.xlu0 %v1515, 110
    %v1519 = vpop.permute.xlu0 %1518
    %1520 = vrot.lane.b32.xlu0 %v1512, 110
    %v1521 = vpop.permute.xlu0 %1520
    %v1522 = vsel %vm353, %v1517, %v1519
    %v1523 = vsel %vm353, %v1519, %v1521
    %v1526 = vsel %vm278, %v1522, 0.0
    %v1527 = vsel %vm279, %v1523, 0.0
    %v1530 = vrot.slane %v1526, 4
    %v1531 = vrot.slane %v1527, 4
    %1534 = vst [vmem:[#allocation3 + $0x20] sm:$0xf0] %v1530
    %1535 = vst [vmem:[#allocation3 + $0x28] sm:$0xf0] %v1531
    %v1536 = vld [vmem:[#allocation2] sm:$0xff]
    %v1537 = vld [vmem:[#allocation2 + $0x8] sm:$0xf]
    %v1540 = vcombine.high %v1536, %v1536
    %1541 = vrot.lane.b32.xlu0 %v1536, 96
    %v1542 = vpop.permute.xlu0 %1541
    %1543 = vrot.lane.b32.xlu0 %v1540, 96
    %v1544 = vpop.permute.xlu0 %1543
    %1545 = vrot.lane.b32.xlu0 %v1537, 96
    %v1546 = vpop.permute.xlu0 %1545
    %v1547 = vsel %vm379, %v1542, %v1544
    %v1548 = vsel %vm379, %v1544, %v1546
    %v1551 = vsel %vm246, %v1547, 0.0
    %v1552 = vsel %vm247, %v1548, 0.0
    %1553 = vst [vmem:[#allocation3 + $0x30] sm:$0xf] %v1551
    %1554 = vst [vmem:[#allocation3 + $0x38] sm:$0xf] %v1552
    %v1555 = vld [vmem:[#allocation2] sm:$0xff]
    %v1556 = vld [vmem:[#allocation2 + $0x8] sm:$0xf]
    %v1559 = vcombine.low %v1555, %v1555
    %v1560 = vcombine.low %v1556, %v1556
    %1561 = vrot.lane.b32.xlu0 %v1559, 95
    %v1562 = vpop.permute.xlu0 %1561
    %1563 = vrot.lane.b32.xlu0 %v1555, 95
    %v1564 = vpop.permute.xlu0 %1563
    %1565 = vrot.lane.b32.xlu0 %v1560, 95
    %v1566 = vpop.permute.xlu0 %1565
    %v1567 = vsel %vm400, %v1562, %v1564
    %v1568 = vsel %vm400, %v1564, %v1566
    %1571 = vst [vmem:[#allocation3 + $0x30] sm:$0xf0] %v1567
    %1572 = vst [vmem:[#allocation3 + $0x38] sm:$0xf0] %v1568
    %v1573 = vld [vmem:[#allocation2] sm:$0xff]
    %v1574 = vld [vmem:[#allocation2 + $0x8] sm:$0xf]
    %v1577 = vcombine.high %v1573, %v1573
    %1578 = vrot.lane.b32.xlu0 %v1573, 94
    %v1579 = vpop.permute.xlu0 %1578
    %1580 = vrot.lane.b32.xlu0 %v1577, 94
    %v1581 = vpop.permute.xlu0 %1580
    %1582 = vrot.lane.b32.xlu0 %v1574, 94
    %v1583 = vpop.permute.xlu0 %1582
    %v1584 = vsel %vm418, %v1579, %v1581
    %v1585 = vsel %vm418, %v1581, %v1583
    %v1588 = vsel %vm278, %v1584, 0.0
    %v1589 = vsel %vm279, %v1585, 0.0
    %1590 = vst [vmem:[#allocation3 + $0x40] sm:$0xf] %v1588
    %1591 = vst [vmem:[#allocation3 + $0x48] sm:$0xf] %v1589
    %v1592 = vld [vmem:[%s7] sm:$0xf]
    %v1593 = vld [vmem:[#allocation3] sm:$0xff]
    %v1594 = vld [vmem:[#allocation3 + $0x8] sm:$0xff]
    %v1595 = vld [vmem:[#allocation3 + $0x10] sm:$0xff]
    %v1596 = vld [vmem:[#allocation3 + $0x18] sm:$0xff]
    %v1597 = vld [vmem:[#allocation3 + $0x20] sm:$0xff]
    %v1598 = vld [vmem:[#allocation3 + $0x28] sm:$0xff]
    %v1599 = vld [vmem:[#allocation3 + $0x30] sm:$0xff]
    %v1600 = vld [vmem:[#allocation3 + $0x38] sm:$0xff]
    %v1601 = vld [vmem:[#allocation3 + $0x40] sm:$0xf]
    %v1602 = vld [vmem:[#allocation3 + $0x48] sm:$0xf]
    %v1603 = vld [vmem:[%s8] sm:$0xf]
    %1605 = vset.pattern.permute.xlu0 0
    %1606 = vperm.xlu0 %1605, %v1603
    %v1607 = vpop.permute.xlu0 %1606
    %v1610 = vsel %vm444, %v1592, 0
    %v1613 = vsel %vm448, %v1601, 0
    %v1616 = vsel %vm448, %v1602, 0
    %1618 = vmatprep.subr.mxu0 %v1594
    %1619 = vmatpush1.msra.mxu0 %v1593
    %1620 = vmatprep.subr.mxu0 %v1596
    %1621 = vmatpush1.msra.mxu0 %v1595
    %1622 = vmatprep.subr.mxu0 %v1598
    %1623 = vmatpush1.msra.mxu0 %v1597
    %1624 = vmatprep.subr.mxu0 %v1600
    %1625 = vmatpush1.msra.mxu0 %v1599
    %1626 = vmatprep.subr.mxu0 %v1616
    %1627 = vmatpush1.msra.mxu0 %v1613
    %1628 = vmatprep.subr.mxu0 0.0
    %1629 = vmatpush1.msra.mxu0 0.0
    %1630 = vmatprep.subr.mxu0 0.0
    %1631 = vmatpush1.msra.mxu0 0.0
    %1632 = vmatprep.subr.mxu0 0.0
    %1633 = vmatpush1.msra.mxu0 0.0
    %1634 = vmatprep.subr.mxu0 0.0
    %1635 = vmatpush1.msra.mxu0 0.0
    %1636 = vmatprep.subr.mxu0 0.0
    %1637 = vmatpush1.msra.mxu0 0.0
    %1638 = vmatprep.subr.mxu0 0.0
    %1639 = vmatpush1.msra.mxu0 0.0
    %1640 = vmatprep.subr.mxu0 0.0
    %1641 = vmatpush1.msra.mxu0 0.0
    %1642 = vmatprep.subr.mxu0 0.0
    %1643 = vmatpush1.msra.mxu0 0.0
    %1644 = vmatprep.subr.mxu0 0.0
    %1645 = vmatpush1.msra.mxu0 0.0
    %1646 = vmatprep.subr.mxu0 0.0
    %1647 = vmatpush1.msra.mxu0 0.0
    %1648 = vmatprep.subr.mxu0 0.0
    %1649 = vmatpush1.msra.mxu0 0.0
    %1650 = vmatprep.subr.mxu0 0.0
    %1651 = vmatpush1.msra.mxu0 0.0
    %1652 = vmatprep.subr.mxu0 0.0
    %1653 = vmatpush1.msra.mxu0 0.0
    %1654 = vmatprep.subr.mxu0 0.0
    %1655 = vmatpush1.msra.mxu0 0.0
    %1656 = vmatprep.subr.mxu0 0.0
    %1657 = vmatpush1.msra.mxu0 0.0
    %1658 = vmatprep.subr.mxu0 0.0
    %1659 = vmatpush1.msra.mxu0 0.0
    %1660 = vmatprep.subr.mxu0 0.0
    %1661 = vmatpush1.msra.mxu0 0.0
    %1662 = vmatprep.subr.mxu0 0.0
    %1663 = vmatpush1.msra.mxu0 0.0
    %1664 = vmatprep.subr.mxu0 0.0
    %1665 = vmatpush1.msra.mxu0 0.0
    %1666 = vmatprep.subr.mxu0 0.0
    %1667 = vmatpush1.msra.mxu0 0.0
    %1668 = vmatprep.subr.mxu0 0.0
    %1669 = vmatpush1.msra.mxu0 0.0
    %1670 = vmatprep.subr.mxu0 0.0
    %1671 = vmatpush1.msra.mxu0 0.0
    %1672 = vmatprep.subr.mxu0 0.0
    %1673 = vmatpush1.msra.mxu0 0.0
    %1674 = vmatprep.subr.mxu0 0.0
    %1675 = vmatpush1.msra.mxu0 0.0
    %1676 = vmatprep.subr.mxu0 0.0
    %1677 = vmatpush1.msra.mxu0 0.0
    %1678 = vmatprep.subr.mxu0 0.0
    %1679 = vmatpush1.msra.mxu0 0.0
    %1680 = vmatprep.subr.mxu0 0.0
    %1681 = vmatpush1.msra.mxu0 0.0
    %1682 = vmatprep.mubr.f32.mxu0 0.0
    %1683 = vmatmul.mubr.f32.gmra.mrb[0].mxu0 %v1610
    %v1684 = vpop.f32.mrb[0].mxu0
    %v1685 = vadd.f32 %v1607, %v1684
    %v1686 = vpop.f32.mrb[0].mxu0
    %v1687 = vadd.f32 %v1607, %v1686
    %1688 = vdwg.mxu0
    %v1689 = vadd.f32 %v1685, %v908
    %v1690 = vadd.f32 %v1687, %v910
    %v1693 = vcombine.low %v1689, %v1690
    %s1695 = scalar_lea.vmem [#allocation7], 8
    %1696 = vst [vmem:[%s1695] sm:$0xff] %v1693
    // Predicated region
    $region42: #{tpu_custom_call.1} parent=1 // pred_check
      _
    $region43: #{tpu_custom_call.1} parent=1 // pred_check_branch
      %1698 = sbr.rel (0) target = $region45
    $region44: #{tpu_custom_call.1} parent=1 // pred_region
      %s1700 = ssub.s32 256, 256
      %1701 = vsyncadd [#allocation6], %s1700
      %s1702 = sshll.u32 [#allocation7], 4
      %s1703 = int_to_ptr.vmem [resolvable:$true] %s1702
      %1708 = dma.vmem_to_hbm [thread:$0]  %s1703, 256, %s9, [#allocation6], 128, 128, 8
    $region45: #{tpu_custom_call.1} parent=1 // pred_fallthru
      _
    // Predicated region
    $region46: #{tpu_custom_call.1} parent=1 // pred_check
      _
    $region47: #{tpu_custom_call.1} parent=1 // pred_check_branch
      %1710 = sbr.rel (0) target = $region49
    $region48: #{tpu_custom_call.1} parent=1 // pred_region
      %1711 = dma.done [#allocation6], 256
    $region49: #{tpu_custom_call.1} parent=1 // pred_fallthru
      _
    %1712 = vsyncpa [#allocation5], 1
    %1713 = vsyncpa [#allocation6], 1

</llo_original>
